<compile_context>
chip_gen: v7x
topology: tpu7x:2x2x1
jax: 0.10.0
libtpu: 0.0.40
codegen_flags: <defaults>
</compile_context>

<pallas_src>
import functools
import numpy as np
import jax
import jax.numpy as jnp
from jax import lax
from jax.experimental import pallas as pl
from jax.experimental.pallas import tpu as pltpu

SQRT_HALF = 0.7071067811865476
_MATMUL_DTYPE = jnp.float32     # jnp.bfloat16 on v6e/v7x if numerics permit


def _gelu_exact(x):
    # nn.GELU() default = exact (erf-based) GELU
    return 0.5 * x * (1.0 + lax.erf(x * SQRT_HALF))


# --------------------------------------------------------------------------
# Fused kernel: depthwise 7x7 conv + BN + GELU + 1x1 conv + BN + GELU
#   xpad_ref : (1, H+K-1, (W+K-1)*C)   zero-padded input, (W,C) lane-folded
#   wdw_ref  : (K*K, W*C)              depthwise weights tiled along W
#   s1/t1    : (1, W*C)                folded BN1 scale/shift (tiled along W)
#   wpw_ref  : (W*C, W*Cout)           block-diagonal kron(I_W, W_pw)
#   s2/t2    : (1, W*Cout)             folded BN2 scale/shift (tiled along W)
#   o_ref    : (1, H, W*Cout)
# --------------------------------------------------------------------------
def _dwconv_fused_kernel(xpad_ref, wdw_ref, s1_ref, t1_ref,
                         wpw_ref, s2_ref, t2_ref, o_ref, *, H, W, C, K):
    WC = W * C
    xp = xpad_ref[0]                  # (H+K-1, (W+K-1)*C)
    wdw = wdw_ref[...]                # (K*K, WC)

    # Depthwise 7x7: 49 lane-shifted multiply-adds, lane width = W*C.
    acc = jnp.zeros((H, WC), jnp.float32)
    for i in range(K):
        for j in range(K):
            tap = i * K + j
            acc = acc + xp[i:i + H, j * C:j * C + WC] * wdw[tap:tap + 1, :]

    # BN1 (folded) + GELU, stays in vregs.
    y = _gelu_exact(acc * s1_ref[...] + t1_ref[...])          # (H, WC)

    # 1x1 conv as a single lane-dense MXU matmul (block-diagonal weight).
    z = jnp.dot(y.astype(_MATMUL_DTYPE),
                wpw_ref[...].astype(_MATMUL_DTYPE),
                preferred_element_type=jnp.float32)           # (H, W*Cout)

    # BN2 (folded) + GELU, lane-dense store.
    o_ref[0] = _gelu_exact(z * s2_ref[...] + t2_ref[...])


def dwconv_forward(x_nchw, params):
    """DWCONV forward. Input/output are NCHW like the PyTorch module."""
    x = jnp.transpose(x_nchw, (0, 2, 3, 1)).astype(jnp.float32)   # NCHW -> NHWC
    N, H, W, Cin = x.shape
    Cout = params['w_pw'].shape[1]
    K, pad = 7, 3
    WC, WCo = W * Cin, W * Cout

    # Zero padding (Conv2d default), then fold (W, C) into the lane axis.
    xpad = jnp.pad(x, ((0, 0), (pad, pad), (pad, pad), (0, 0)))
    xpad_flat = xpad.reshape(N, H + 2 * pad, (W + 2 * pad) * Cin)

    # Lane-folded parameter views (tiny; computed once per call).
    wdw_tiled = jnp.tile(params['w_dw'].reshape(K * K, 1, Cin),
                         (1, W, 1)).reshape(K * K, WC)
    s1t = jnp.tile(params['s1'], W).reshape(1, WC)
    t1t = jnp.tile(params['t1'], W).reshape(1, WC)
    wpw_blk = jnp.kron(jnp.eye(W, dtype=jnp.float32), params['w_pw'])   # (WC, WCo)
    s2t = jnp.tile(params['s2'], W).reshape(1, WCo)
    t2t = jnp.tile(params['t2'], W).reshape(1, WCo)

    out = pl.pallas_call(
        functools.partial(_dwconv_fused_kernel, H=H, W=W, C=Cin, K=K),
        out_shape=jax.ShapeDtypeStruct((N, H, WCo), jnp.float32),
        grid=(N,),
        in_specs=[
            pl.BlockSpec((1, H + 2 * pad, (W + 2 * pad) * Cin), lambda n: (n, 0, 0)),
            pl.BlockSpec((K * K, WC), lambda n: (0, 0)),
            pl.BlockSpec((1, WC), lambda n: (0, 0)),
            pl.BlockSpec((1, WC), lambda n: (0, 0)),
            pl.BlockSpec((WC, WCo), lambda n: (0, 0)),
            pl.BlockSpec((1, WCo), lambda n: (0, 0)),
            pl.BlockSpec((1, WCo), lambda n: (0, 0)),
        ],
        out_specs=pl.BlockSpec((1, H, WCo), lambda n: (n, 0, 0)),
        compiler_params=pltpu.CompilerParams(dimension_semantics=("parallel",)),
    )(xpad_flat, wdw_tiled, s1t, t1t, wpw_blk, s2t, t2t)

    y = out.reshape(N, H, W, Cout)
    return jnp.transpose(y, (0, 3, 1, 2))                          # back to NCHW


# --------------------------------------------------------------------------
# Pure-JAX reference (for correctness check only)
# --------------------------------------------------------------------------
def dwconv_reference(x_nchw, p):
    C = x_nchw.shape[1]
    w1 = jnp.transpose(p['w_dw'], (2, 0, 1))[:, None, :, :]        # (C,1,7,7)
    y = lax.conv_general_dilated(x_nchw, w1, (1, 1), ((3, 3), (3, 3)),
                                 dimension_numbers=('NCHW', 'OIHW', 'NCHW'),
                                 feature_group_count=C)
    y = y * p['s1'][None, :, None, None] + p['t1'][None, :, None, None]
    y = jax.nn.gelu(y, approximate=False)
    w2 = jnp.transpose(p['w_pw'], (1, 0))[:, :, None, None]        # (Cout,Cin,1,1)
    z = lax.conv_general_dilated(y, w2, (1, 1), 'VALID',
                                 dimension_numbers=('NCHW', 'OIHW', 'NCHW'))
    z = z * p['s2'][None, :, None, None] + p['t2'][None, :, None, None]
    return jax.nn.gelu(z, approximate=False)


# --------------------------------------------------------------------------
# Deterministic parameter construction (BatchNorm folded in inference mode)
# --------------------------------------------------------------------------
def init_params(key, in_ch=4, out_ch=8):
    ks = jax.random.split(key, 10)
    w_dw = 0.1 * jax.random.normal(ks[0], (7, 7, in_ch), jnp.float32)   # torch (C,1,7,7) -> (7,7,C)
    w_pw = 0.2 * jax.random.normal(ks[1], (in_ch, out_ch), jnp.float32)  # torch (Cout,Cin,1,1) -> (Cin,Cout)

    def bn_fold(kg, kb, km, kv, c, eps=1e-5):
        gamma = 1.0 + 0.1 * jax.random.normal(kg, (c,), jnp.float32)
        beta = 0.1 * jax.random.normal(kb, (c,), jnp.float32)
        mean = 0.1 * jax.random.normal(km, (c,), jnp.float32)
        var = 1.0 + 0.1 * jnp.abs(jax.random.normal(kv, (c,), jnp.float32))
        scale = gamma / jnp.sqrt(var + eps)
        shift = beta - mean * scale
        return scale, shift

    s1, t1 = bn_fold(ks[2], ks[3], ks[4], ks[5], in_ch)
    s2, t2 = bn_fold(ks[6], ks[7], ks[8], ks[9], out_ch)
    return dict(w_dw=w_dw, w_pw=w_pw, s1=s1, t1=t1, s2=s2, t2=t2)


if __name__ == "__main__":
    key = jax.random.PRNGKey(0)
    pkey, xkey = jax.random.split(key)

    in_ch, out_ch = 4, 8
    params = init_params(pkey, in_ch=in_ch, out_ch=out_ch)
    x = jax.random.normal(xkey, (2, in_ch, 16, 16), jnp.float32)   # NCHW

    fwd = jax.jit(dwconv_forward)
    y = jax.block_until_ready(fwd(x, params))

    assert y.shape == (2, out_ch, 16, 16), y.shape
    assert bool(jnp.all(jnp.isfinite(y)))

    y_ref = jax.block_until_ready(jax.jit(dwconv_reference)(x, params))
    err = float(jnp.max(jnp.abs(y - y_ref)))
    assert err < 5e-2, f"max abs diff vs reference: {err}"

    print("KERNEL_OK")
</pallas_src>

<mosaic_0001>
module attributes {stable_mosaic.version = 11 : i64} {
  func.func @_dwconv_fused_kernel(%arg0: i32, %arg1: memref<1x22x88xf32, #tpu.memory_space<vmem>>, %arg2: memref<49x64xf32, #tpu.memory_space<vmem>>, %arg3: memref<1x64xf32, #tpu.memory_space<vmem>>, %arg4: memref<1x64xf32, #tpu.memory_space<vmem>>, %arg5: memref<64x128xf32, #tpu.memory_space<vmem>>, %arg6: memref<1x128xf32, #tpu.memory_space<vmem>>, %arg7: memref<1x128xf32, #tpu.memory_space<vmem>>, %arg8: memref<1x16x128xf32, #tpu.memory_space<vmem>>) attributes {dimension_semantics = [#tpu.dimension_semantics<parallel>], iteration_bounds = array<i64: 2>, scalar_prefetch = 0 : i64, scratch_operands = 0 : i64, tpu.core_type = #tpu.core_type<tc>, window_params = [{transform_indices = @transform_0, window_bounds = array<i64: 1, 22, 88>}, {pipeline_mode = #tpu.pipeline_mode<synchronous>, transform_indices = @transform_1, window_bounds = array<i64: 49, 64>}, {pipeline_mode = #tpu.pipeline_mode<synchronous>, transform_indices = @transform_2, window_bounds = array<i64: 1, 64>}, {pipeline_mode = #tpu.pipeline_mode<synchronous>, transform_indices = @transform_3, window_bounds = array<i64: 1, 64>}, {pipeline_mode = #tpu.pipeline_mode<synchronous>, transform_indices = @transform_4, window_bounds = array<i64: 64, 128>}, {pipeline_mode = #tpu.pipeline_mode<synchronous>, transform_indices = @transform_5, window_bounds = array<i64: 1, 128>}, {pipeline_mode = #tpu.pipeline_mode<synchronous>, transform_indices = @transform_6, window_bounds = array<i64: 1, 128>}, {transform_indices = @transform_7, window_bounds = array<i64: 1, 16, 128>}]} {
    %c0 = arith.constant 0 : index
    %c0_0 = arith.constant 0 : index
    %c0_1 = arith.constant 0 : index
    %0 = vector.load %arg1[%c0, %c0_0, %c0_1] : memref<1x22x88xf32, #tpu.memory_space<vmem>>, vector<1x22x88xf32>
    %1 = vector.shape_cast %0 : vector<1x22x88xf32> to vector<22x88xf32>
    %c0_2 = arith.constant 0 : index
    %c0_3 = arith.constant 0 : index
    %2 = vector.load %arg2[%c0_2, %c0_3] : memref<49x64xf32, #tpu.memory_space<vmem>>, vector<49x64xf32>
    %cst = arith.constant 0.000000e+00 : f32
    %3 = vector.broadcast %cst : f32 to vector<16x64xf32>
    %4 = vector.extract_strided_slice %1 {offsets = [0, 0], sizes = [16, 64], strides = [1, 1]} : vector<22x88xf32> to vector<16x64xf32>
    %5 = vector.extract_strided_slice %2 {offsets = [0, 0], sizes = [1, 64], strides = [1, 1]} : vector<49x64xf32> to vector<1x64xf32>
    %6 = vector.broadcast %5 : vector<1x64xf32> to vector<16x64xf32>
    %7 = arith.mulf %4, %6 : vector<16x64xf32>
    %8 = arith.addf %3, %7 : vector<16x64xf32>
    %9 = vector.extract_strided_slice %1 {offsets = [0, 4], sizes = [16, 64], strides = [1, 1]} : vector<22x88xf32> to vector<16x64xf32>
    %10 = vector.extract_strided_slice %2 {offsets = [1, 0], sizes = [1, 64], strides = [1, 1]} : vector<49x64xf32> to vector<1x64xf32>
    %11 = vector.broadcast %10 : vector<1x64xf32> to vector<16x64xf32>
    %12 = arith.mulf %9, %11 : vector<16x64xf32>
    %13 = arith.addf %8, %12 : vector<16x64xf32>
    %14 = vector.extract_strided_slice %1 {offsets = [0, 8], sizes = [16, 64], strides = [1, 1]} : vector<22x88xf32> to vector<16x64xf32>
    %15 = vector.extract_strided_slice %2 {offsets = [2, 0], sizes = [1, 64], strides = [1, 1]} : vector<49x64xf32> to vector<1x64xf32>
    %16 = vector.broadcast %15 : vector<1x64xf32> to vector<16x64xf32>
    %17 = arith.mulf %14, %16 : vector<16x64xf32>
    %18 = arith.addf %13, %17 : vector<16x64xf32>
    %19 = vector.extract_strided_slice %1 {offsets = [0, 12], sizes = [16, 64], strides = [1, 1]} : vector<22x88xf32> to vector<16x64xf32>
    %20 = vector.extract_strided_slice %2 {offsets = [3, 0], sizes = [1, 64], strides = [1, 1]} : vector<49x64xf32> to vector<1x64xf32>
    %21 = vector.broadcast %20 : vector<1x64xf32> to vector<16x64xf32>
    %22 = arith.mulf %19, %21 : vector<16x64xf32>
    %23 = arith.addf %18, %22 : vector<16x64xf32>
    %24 = vector.extract_strided_slice %1 {offsets = [0, 16], sizes = [16, 64], strides = [1, 1]} : vector<22x88xf32> to vector<16x64xf32>
    %25 = vector.extract_strided_slice %2 {offsets = [4, 0], sizes = [1, 64], strides = [1, 1]} : vector<49x64xf32> to vector<1x64xf32>
    %26 = vector.broadcast %25 : vector<1x64xf32> to vector<16x64xf32>
    %27 = arith.mulf %24, %26 : vector<16x64xf32>
    %28 = arith.addf %23, %27 : vector<16x64xf32>
    %29 = vector.extract_strided_slice %1 {offsets = [0, 20], sizes = [16, 64], strides = [1, 1]} : vector<22x88xf32> to vector<16x64xf32>
    %30 = vector.extract_strided_slice %2 {offsets = [5, 0], sizes = [1, 64], strides = [1, 1]} : vector<49x64xf32> to vector<1x64xf32>
    %31 = vector.broadcast %30 : vector<1x64xf32> to vector<16x64xf32>
    %32 = arith.mulf %29, %31 : vector<16x64xf32>
    %33 = arith.addf %28, %32 : vector<16x64xf32>
    %34 = vector.extract_strided_slice %1 {offsets = [0, 24], sizes = [16, 64], strides = [1, 1]} : vector<22x88xf32> to vector<16x64xf32>
    %35 = vector.extract_strided_slice %2 {offsets = [6, 0], sizes = [1, 64], strides = [1, 1]} : vector<49x64xf32> to vector<1x64xf32>
    %36 = vector.broadcast %35 : vector<1x64xf32> to vector<16x64xf32>
    %37 = arith.mulf %34, %36 : vector<16x64xf32>
    %38 = arith.addf %33, %37 : vector<16x64xf32>
    %39 = vector.extract_strided_slice %1 {offsets = [1, 0], sizes = [16, 64], strides = [1, 1]} : vector<22x88xf32> to vector<16x64xf32>
    %40 = vector.extract_strided_slice %2 {offsets = [7, 0], sizes = [1, 64], strides = [1, 1]} : vector<49x64xf32> to vector<1x64xf32>
    %41 = vector.broadcast %40 : vector<1x64xf32> to vector<16x64xf32>
    %42 = arith.mulf %39, %41 : vector<16x64xf32>
    %43 = arith.addf %38, %42 : vector<16x64xf32>
    %44 = vector.extract_strided_slice %1 {offsets = [1, 4], sizes = [16, 64], strides = [1, 1]} : vector<22x88xf32> to vector<16x64xf32>
    %45 = vector.extract_strided_slice %2 {offsets = [8, 0], sizes = [1, 64], strides = [1, 1]} : vector<49x64xf32> to vector<1x64xf32>
    %46 = vector.broadcast %45 : vector<1x64xf32> to vector<16x64xf32>
    %47 = arith.mulf %44, %46 : vector<16x64xf32>
    %48 = arith.addf %43, %47 : vector<16x64xf32>
    %49 = vector.extract_strided_slice %1 {offsets = [1, 8], sizes = [16, 64], strides = [1, 1]} : vector<22x88xf32> to vector<16x64xf32>
    %50 = vector.extract_strided_slice %2 {offsets = [9, 0], sizes = [1, 64], strides = [1, 1]} : vector<49x64xf32> to vector<1x64xf32>
    %51 = vector.broadcast %50 : vector<1x64xf32> to vector<16x64xf32>
    %52 = arith.mulf %49, %51 : vector<16x64xf32>
    %53 = arith.addf %48, %52 : vector<16x64xf32>
    %54 = vector.extract_strided_slice %1 {offsets = [1, 12], sizes = [16, 64], strides = [1, 1]} : vector<22x88xf32> to vector<16x64xf32>
    %55 = vector.extract_strided_slice %2 {offsets = [10, 0], sizes = [1, 64], strides = [1, 1]} : vector<49x64xf32> to vector<1x64xf32>
    %56 = vector.broadcast %55 : vector<1x64xf32> to vector<16x64xf32>
    %57 = arith.mulf %54, %56 : vector<16x64xf32>
    %58 = arith.addf %53, %57 : vector<16x64xf32>
    %59 = vector.extract_strided_slice %1 {offsets = [1, 16], sizes = [16, 64], strides = [1, 1]} : vector<22x88xf32> to vector<16x64xf32>
    %60 = vector.extract_strided_slice %2 {offsets = [11, 0], sizes = [1, 64], strides = [1, 1]} : vector<49x64xf32> to vector<1x64xf32>
    %61 = vector.broadcast %60 : vector<1x64xf32> to vector<16x64xf32>
    %62 = arith.mulf %59, %61 : vector<16x64xf32>
    %63 = arith.addf %58, %62 : vector<16x64xf32>
    %64 = vector.extract_strided_slice %1 {offsets = [1, 20], sizes = [16, 64], strides = [1, 1]} : vector<22x88xf32> to vector<16x64xf32>
    %65 = vector.extract_strided_slice %2 {offsets = [12, 0], sizes = [1, 64], strides = [1, 1]} : vector<49x64xf32> to vector<1x64xf32>
    %66 = vector.broadcast %65 : vector<1x64xf32> to vector<16x64xf32>
    %67 = arith.mulf %64, %66 : vector<16x64xf32>
    %68 = arith.addf %63, %67 : vector<16x64xf32>
    %69 = vector.extract_strided_slice %1 {offsets = [1, 24], sizes = [16, 64], strides = [1, 1]} : vector<22x88xf32> to vector<16x64xf32>
    %70 = vector.extract_strided_slice %2 {offsets = [13, 0], sizes = [1, 64], strides = [1, 1]} : vector<49x64xf32> to vector<1x64xf32>
    %71 = vector.broadcast %70 : vector<1x64xf32> to vector<16x64xf32>
    %72 = arith.mulf %69, %71 : vector<16x64xf32>
    %73 = arith.addf %68, %72 : vector<16x64xf32>
    %74 = vector.extract_strided_slice %1 {offsets = [2, 0], sizes = [16, 64], strides = [1, 1]} : vector<22x88xf32> to vector<16x64xf32>
    %75 = vector.extract_strided_slice %2 {offsets = [14, 0], sizes = [1, 64], strides = [1, 1]} : vector<49x64xf32> to vector<1x64xf32>
    %76 = vector.broadcast %75 : vector<1x64xf32> to vector<16x64xf32>
    %77 = arith.mulf %74, %76 : vector<16x64xf32>
    %78 = arith.addf %73, %77 : vector<16x64xf32>
    %79 = vector.extract_strided_slice %1 {offsets = [2, 4], sizes = [16, 64], strides = [1, 1]} : vector<22x88xf32> to vector<16x64xf32>
    %80 = vector.extract_strided_slice %2 {offsets = [15, 0], sizes = [1, 64], strides = [1, 1]} : vector<49x64xf32> to vector<1x64xf32>
    %81 = vector.broadcast %80 : vector<1x64xf32> to vector<16x64xf32>
    %82 = arith.mulf %79, %81 : vector<16x64xf32>
    %83 = arith.addf %78, %82 : vector<16x64xf32>
    %84 = vector.extract_strided_slice %1 {offsets = [2, 8], sizes = [16, 64], strides = [1, 1]} : vector<22x88xf32> to vector<16x64xf32>
    %85 = vector.extract_strided_slice %2 {offsets = [16, 0], sizes = [1, 64], strides = [1, 1]} : vector<49x64xf32> to vector<1x64xf32>
    %86 = vector.broadcast %85 : vector<1x64xf32> to vector<16x64xf32>
    %87 = arith.mulf %84, %86 : vector<16x64xf32>
    %88 = arith.addf %83, %87 : vector<16x64xf32>
    %89 = vector.extract_strided_slice %1 {offsets = [2, 12], sizes = [16, 64], strides = [1, 1]} : vector<22x88xf32> to vector<16x64xf32>
    %90 = vector.extract_strided_slice %2 {offsets = [17, 0], sizes = [1, 64], strides = [1, 1]} : vector<49x64xf32> to vector<1x64xf32>
    %91 = vector.broadcast %90 : vector<1x64xf32> to vector<16x64xf32>
    %92 = arith.mulf %89, %91 : vector<16x64xf32>
    %93 = arith.addf %88, %92 : vector<16x64xf32>
    %94 = vector.extract_strided_slice %1 {offsets = [2, 16], sizes = [16, 64], strides = [1, 1]} : vector<22x88xf32> to vector<16x64xf32>
    %95 = vector.extract_strided_slice %2 {offsets = [18, 0], sizes = [1, 64], strides = [1, 1]} : vector<49x64xf32> to vector<1x64xf32>
    %96 = vector.broadcast %95 : vector<1x64xf32> to vector<16x64xf32>
    %97 = arith.mulf %94, %96 : vector<16x64xf32>
    %98 = arith.addf %93, %97 : vector<16x64xf32>
    %99 = vector.extract_strided_slice %1 {offsets = [2, 20], sizes = [16, 64], strides = [1, 1]} : vector<22x88xf32> to vector<16x64xf32>
    %100 = vector.extract_strided_slice %2 {offsets = [19, 0], sizes = [1, 64], strides = [1, 1]} : vector<49x64xf32> to vector<1x64xf32>
    %101 = vector.broadcast %100 : vector<1x64xf32> to vector<16x64xf32>
    %102 = arith.mulf %99, %101 : vector<16x64xf32>
    %103 = arith.addf %98, %102 : vector<16x64xf32>
    %104 = vector.extract_strided_slice %1 {offsets = [2, 24], sizes = [16, 64], strides = [1, 1]} : vector<22x88xf32> to vector<16x64xf32>
    %105 = vector.extract_strided_slice %2 {offsets = [20, 0], sizes = [1, 64], strides = [1, 1]} : vector<49x64xf32> to vector<1x64xf32>
    %106 = vector.broadcast %105 : vector<1x64xf32> to vector<16x64xf32>
    %107 = arith.mulf %104, %106 : vector<16x64xf32>
    %108 = arith.addf %103, %107 : vector<16x64xf32>
    %109 = vector.extract_strided_slice %1 {offsets = [3, 0], sizes = [16, 64], strides = [1, 1]} : vector<22x88xf32> to vector<16x64xf32>
    %110 = vector.extract_strided_slice %2 {offsets = [21, 0], sizes = [1, 64], strides = [1, 1]} : vector<49x64xf32> to vector<1x64xf32>
    %111 = vector.broadcast %110 : vector<1x64xf32> to vector<16x64xf32>
    %112 = arith.mulf %109, %111 : vector<16x64xf32>
    %113 = arith.addf %108, %112 : vector<16x64xf32>
    %114 = vector.extract_strided_slice %1 {offsets = [3, 4], sizes = [16, 64], strides = [1, 1]} : vector<22x88xf32> to vector<16x64xf32>
    %115 = vector.extract_strided_slice %2 {offsets = [22, 0], sizes = [1, 64], strides = [1, 1]} : vector<49x64xf32> to vector<1x64xf32>
    %116 = vector.broadcast %115 : vector<1x64xf32> to vector<16x64xf32>
    %117 = arith.mulf %114, %116 : vector<16x64xf32>
    %118 = arith.addf %113, %117 : vector<16x64xf32>
    %119 = vector.extract_strided_slice %1 {offsets = [3, 8], sizes = [16, 64], strides = [1, 1]} : vector<22x88xf32> to vector<16x64xf32>
    %120 = vector.extract_strided_slice %2 {offsets = [23, 0], sizes = [1, 64], strides = [1, 1]} : vector<49x64xf32> to vector<1x64xf32>
    %121 = vector.broadcast %120 : vector<1x64xf32> to vector<16x64xf32>
    %122 = arith.mulf %119, %121 : vector<16x64xf32>
    %123 = arith.addf %118, %122 : vector<16x64xf32>
    %124 = vector.extract_strided_slice %1 {offsets = [3, 12], sizes = [16, 64], strides = [1, 1]} : vector<22x88xf32> to vector<16x64xf32>
    %125 = vector.extract_strided_slice %2 {offsets = [24, 0], sizes = [1, 64], strides = [1, 1]} : vector<49x64xf32> to vector<1x64xf32>
    %126 = vector.broadcast %125 : vector<1x64xf32> to vector<16x64xf32>
    %127 = arith.mulf %124, %126 : vector<16x64xf32>
    %128 = arith.addf %123, %127 : vector<16x64xf32>
    %129 = vector.extract_strided_slice %1 {offsets = [3, 16], sizes = [16, 64], strides = [1, 1]} : vector<22x88xf32> to vector<16x64xf32>
    %130 = vector.extract_strided_slice %2 {offsets = [25, 0], sizes = [1, 64], strides = [1, 1]} : vector<49x64xf32> to vector<1x64xf32>
    %131 = vector.broadcast %130 : vector<1x64xf32> to vector<16x64xf32>
    %132 = arith.mulf %129, %131 : vector<16x64xf32>
    %133 = arith.addf %128, %132 : vector<16x64xf32>
    %134 = vector.extract_strided_slice %1 {offsets = [3, 20], sizes = [16, 64], strides = [1, 1]} : vector<22x88xf32> to vector<16x64xf32>
    %135 = vector.extract_strided_slice %2 {offsets = [26, 0], sizes = [1, 64], strides = [1, 1]} : vector<49x64xf32> to vector<1x64xf32>
    %136 = vector.broadcast %135 : vector<1x64xf32> to vector<16x64xf32>
    %137 = arith.mulf %134, %136 : vector<16x64xf32>
    %138 = arith.addf %133, %137 : vector<16x64xf32>
    %139 = vector.extract_strided_slice %1 {offsets = [3, 24], sizes = [16, 64], strides = [1, 1]} : vector<22x88xf32> to vector<16x64xf32>
    %140 = vector.extract_strided_slice %2 {offsets = [27, 0], sizes = [1, 64], strides = [1, 1]} : vector<49x64xf32> to vector<1x64xf32>
    %141 = vector.broadcast %140 : vector<1x64xf32> to vector<16x64xf32>
    %142 = arith.mulf %139, %141 : vector<16x64xf32>
    %143 = arith.addf %138, %142 : vector<16x64xf32>
    %144 = vector.extract_strided_slice %1 {offsets = [4, 0], sizes = [16, 64], strides = [1, 1]} : vector<22x88xf32> to vector<16x64xf32>
    %145 = vector.extract_strided_slice %2 {offsets = [28, 0], sizes = [1, 64], strides = [1, 1]} : vector<49x64xf32> to vector<1x64xf32>
    %146 = vector.broadcast %145 : vector<1x64xf32> to vector<16x64xf32>
    %147 = arith.mulf %144, %146 : vector<16x64xf32>
    %148 = arith.addf %143, %147 : vector<16x64xf32>
    %149 = vector.extract_strided_slice %1 {offsets = [4, 4], sizes = [16, 64], strides = [1, 1]} : vector<22x88xf32> to vector<16x64xf32>
    %150 = vector.extract_strided_slice %2 {offsets = [29, 0], sizes = [1, 64], strides = [1, 1]} : vector<49x64xf32> to vector<1x64xf32>
    %151 = vector.broadcast %150 : vector<1x64xf32> to vector<16x64xf32>
    %152 = arith.mulf %149, %151 : vector<16x64xf32>
    %153 = arith.addf %148, %152 : vector<16x64xf32>
    %154 = vector.extract_strided_slice %1 {offsets = [4, 8], sizes = [16, 64], strides = [1, 1]} : vector<22x88xf32> to vector<16x64xf32>
    %155 = vector.extract_strided_slice %2 {offsets = [30, 0], sizes = [1, 64], strides = [1, 1]} : vector<49x64xf32> to vector<1x64xf32>
    %156 = vector.broadcast %155 : vector<1x64xf32> to vector<16x64xf32>
    %157 = arith.mulf %154, %156 : vector<16x64xf32>
    %158 = arith.addf %153, %157 : vector<16x64xf32>
    %159 = vector.extract_strided_slice %1 {offsets = [4, 12], sizes = [16, 64], strides = [1, 1]} : vector<22x88xf32> to vector<16x64xf32>
    %160 = vector.extract_strided_slice %2 {offsets = [31, 0], sizes = [1, 64], strides = [1, 1]} : vector<49x64xf32> to vector<1x64xf32>
    %161 = vector.broadcast %160 : vector<1x64xf32> to vector<16x64xf32>
    %162 = arith.mulf %159, %161 : vector<16x64xf32>
    %163 = arith.addf %158, %162 : vector<16x64xf32>
    %164 = vector.extract_strided_slice %1 {offsets = [4, 16], sizes = [16, 64], strides = [1, 1]} : vector<22x88xf32> to vector<16x64xf32>
    %165 = vector.extract_strided_slice %2 {offsets = [32, 0], sizes = [1, 64], strides = [1, 1]} : vector<49x64xf32> to vector<1x64xf32>
    %166 = vector.broadcast %165 : vector<1x64xf32> to vector<16x64xf32>
    %167 = arith.mulf %164, %166 : vector<16x64xf32>
    %168 = arith.addf %163, %167 : vector<16x64xf32>
    %169 = vector.extract_strided_slice %1 {offsets = [4, 20], sizes = [16, 64], strides = [1, 1]} : vector<22x88xf32> to vector<16x64xf32>
    %170 = vector.extract_strided_slice %2 {offsets = [33, 0], sizes = [1, 64], strides = [1, 1]} : vector<49x64xf32> to vector<1x64xf32>
    %171 = vector.broadcast %170 : vector<1x64xf32> to vector<16x64xf32>
    %172 = arith.mulf %169, %171 : vector<16x64xf32>
    %173 = arith.addf %168, %172 : vector<16x64xf32>
    %174 = vector.extract_strided_slice %1 {offsets = [4, 24], sizes = [16, 64], strides = [1, 1]} : vector<22x88xf32> to vector<16x64xf32>
    %175 = vector.extract_strided_slice %2 {offsets = [34, 0], sizes = [1, 64], strides = [1, 1]} : vector<49x64xf32> to vector<1x64xf32>
    %176 = vector.broadcast %175 : vector<1x64xf32> to vector<16x64xf32>
    %177 = arith.mulf %174, %176 : vector<16x64xf32>
    %178 = arith.addf %173, %177 : vector<16x64xf32>
    %179 = vector.extract_strided_slice %1 {offsets = [5, 0], sizes = [16, 64], strides = [1, 1]} : vector<22x88xf32> to vector<16x64xf32>
    %180 = vector.extract_strided_slice %2 {offsets = [35, 0], sizes = [1, 64], strides = [1, 1]} : vector<49x64xf32> to vector<1x64xf32>
    %181 = vector.broadcast %180 : vector<1x64xf32> to vector<16x64xf32>
    %182 = arith.mulf %179, %181 : vector<16x64xf32>
    %183 = arith.addf %178, %182 : vector<16x64xf32>
    %184 = vector.extract_strided_slice %1 {offsets = [5, 4], sizes = [16, 64], strides = [1, 1]} : vector<22x88xf32> to vector<16x64xf32>
    %185 = vector.extract_strided_slice %2 {offsets = [36, 0], sizes = [1, 64], strides = [1, 1]} : vector<49x64xf32> to vector<1x64xf32>
    %186 = vector.broadcast %185 : vector<1x64xf32> to vector<16x64xf32>
    %187 = arith.mulf %184, %186 : vector<16x64xf32>
    %188 = arith.addf %183, %187 : vector<16x64xf32>
    %189 = vector.extract_strided_slice %1 {offsets = [5, 8], sizes = [16, 64], strides = [1, 1]} : vector<22x88xf32> to vector<16x64xf32>
    %190 = vector.extract_strided_slice %2 {offsets = [37, 0], sizes = [1, 64], strides = [1, 1]} : vector<49x64xf32> to vector<1x64xf32>
    %191 = vector.broadcast %190 : vector<1x64xf32> to vector<16x64xf32>
    %192 = arith.mulf %189, %191 : vector<16x64xf32>
    %193 = arith.addf %188, %192 : vector<16x64xf32>
    %194 = vector.extract_strided_slice %1 {offsets = [5, 12], sizes = [16, 64], strides = [1, 1]} : vector<22x88xf32> to vector<16x64xf32>
    %195 = vector.extract_strided_slice %2 {offsets = [38, 0], sizes = [1, 64], strides = [1, 1]} : vector<49x64xf32> to vector<1x64xf32>
    %196 = vector.broadcast %195 : vector<1x64xf32> to vector<16x64xf32>
    %197 = arith.mulf %194, %196 : vector<16x64xf32>
    %198 = arith.addf %193, %197 : vector<16x64xf32>
    %199 = vector.extract_strided_slice %1 {offsets = [5, 16], sizes = [16, 64], strides = [1, 1]} : vector<22x88xf32> to vector<16x64xf32>
    %200 = vector.extract_strided_slice %2 {offsets = [39, 0], sizes = [1, 64], strides = [1, 1]} : vector<49x64xf32> to vector<1x64xf32>
    %201 = vector.broadcast %200 : vector<1x64xf32> to vector<16x64xf32>
    %202 = arith.mulf %199, %201 : vector<16x64xf32>
    %203 = arith.addf %198, %202 : vector<16x64xf32>
    %204 = vector.extract_strided_slice %1 {offsets = [5, 20], sizes = [16, 64], strides = [1, 1]} : vector<22x88xf32> to vector<16x64xf32>
    %205 = vector.extract_strided_slice %2 {offsets = [40, 0], sizes = [1, 64], strides = [1, 1]} : vector<49x64xf32> to vector<1x64xf32>
    %206 = vector.broadcast %205 : vector<1x64xf32> to vector<16x64xf32>
    %207 = arith.mulf %204, %206 : vector<16x64xf32>
    %208 = arith.addf %203, %207 : vector<16x64xf32>
    %209 = vector.extract_strided_slice %1 {offsets = [5, 24], sizes = [16, 64], strides = [1, 1]} : vector<22x88xf32> to vector<16x64xf32>
    %210 = vector.extract_strided_slice %2 {offsets = [41, 0], sizes = [1, 64], strides = [1, 1]} : vector<49x64xf32> to vector<1x64xf32>
    %211 = vector.broadcast %210 : vector<1x64xf32> to vector<16x64xf32>
    %212 = arith.mulf %209, %211 : vector<16x64xf32>
    %213 = arith.addf %208, %212 : vector<16x64xf32>
    %214 = vector.extract_strided_slice %1 {offsets = [6, 0], sizes = [16, 64], strides = [1, 1]} : vector<22x88xf32> to vector<16x64xf32>
    %215 = vector.extract_strided_slice %2 {offsets = [42, 0], sizes = [1, 64], strides = [1, 1]} : vector<49x64xf32> to vector<1x64xf32>
    %216 = vector.broadcast %215 : vector<1x64xf32> to vector<16x64xf32>
    %217 = arith.mulf %214, %216 : vector<16x64xf32>
    %218 = arith.addf %213, %217 : vector<16x64xf32>
    %219 = vector.extract_strided_slice %1 {offsets = [6, 4], sizes = [16, 64], strides = [1, 1]} : vector<22x88xf32> to vector<16x64xf32>
    %220 = vector.extract_strided_slice %2 {offsets = [43, 0], sizes = [1, 64], strides = [1, 1]} : vector<49x64xf32> to vector<1x64xf32>
    %221 = vector.broadcast %220 : vector<1x64xf32> to vector<16x64xf32>
    %222 = arith.mulf %219, %221 : vector<16x64xf32>
    %223 = arith.addf %218, %222 : vector<16x64xf32>
    %224 = vector.extract_strided_slice %1 {offsets = [6, 8], sizes = [16, 64], strides = [1, 1]} : vector<22x88xf32> to vector<16x64xf32>
    %225 = vector.extract_strided_slice %2 {offsets = [44, 0], sizes = [1, 64], strides = [1, 1]} : vector<49x64xf32> to vector<1x64xf32>
    %226 = vector.broadcast %225 : vector<1x64xf32> to vector<16x64xf32>
    %227 = arith.mulf %224, %226 : vector<16x64xf32>
    %228 = arith.addf %223, %227 : vector<16x64xf32>
    %229 = vector.extract_strided_slice %1 {offsets = [6, 12], sizes = [16, 64], strides = [1, 1]} : vector<22x88xf32> to vector<16x64xf32>
    %230 = vector.extract_strided_slice %2 {offsets = [45, 0], sizes = [1, 64], strides = [1, 1]} : vector<49x64xf32> to vector<1x64xf32>
    %231 = vector.broadcast %230 : vector<1x64xf32> to vector<16x64xf32>
    %232 = arith.mulf %229, %231 : vector<16x64xf32>
    %233 = arith.addf %228, %232 : vector<16x64xf32>
    %234 = vector.extract_strided_slice %1 {offsets = [6, 16], sizes = [16, 64], strides = [1, 1]} : vector<22x88xf32> to vector<16x64xf32>
    %235 = vector.extract_strided_slice %2 {offsets = [46, 0], sizes = [1, 64], strides = [1, 1]} : vector<49x64xf32> to vector<1x64xf32>
    %236 = vector.broadcast %235 : vector<1x64xf32> to vector<16x64xf32>
    %237 = arith.mulf %234, %236 : vector<16x64xf32>
    %238 = arith.addf %233, %237 : vector<16x64xf32>
    %239 = vector.extract_strided_slice %1 {offsets = [6, 20], sizes = [16, 64], strides = [1, 1]} : vector<22x88xf32> to vector<16x64xf32>
    %240 = vector.extract_strided_slice %2 {offsets = [47, 0], sizes = [1, 64], strides = [1, 1]} : vector<49x64xf32> to vector<1x64xf32>
    %241 = vector.broadcast %240 : vector<1x64xf32> to vector<16x64xf32>
    %242 = arith.mulf %239, %241 : vector<16x64xf32>
    %243 = arith.addf %238, %242 : vector<16x64xf32>
    %244 = vector.extract_strided_slice %1 {offsets = [6, 24], sizes = [16, 64], strides = [1, 1]} : vector<22x88xf32> to vector<16x64xf32>
    %245 = vector.extract_strided_slice %2 {offsets = [48, 0], sizes = [1, 64], strides = [1, 1]} : vector<49x64xf32> to vector<1x64xf32>
    %246 = vector.broadcast %245 : vector<1x64xf32> to vector<16x64xf32>
    %247 = arith.mulf %244, %246 : vector<16x64xf32>
    %248 = arith.addf %243, %247 : vector<16x64xf32>
    %c0_4 = arith.constant 0 : index
    %c0_5 = arith.constant 0 : index
    %249 = vector.load %arg3[%c0_4, %c0_5] : memref<1x64xf32, #tpu.memory_space<vmem>>, vector<1x64xf32>
    %250 = vector.broadcast %249 : vector<1x64xf32> to vector<16x64xf32>
    %251 = arith.mulf %248, %250 : vector<16x64xf32>
    %c0_6 = arith.constant 0 : index
    %c0_7 = arith.constant 0 : index
    %252 = vector.load %arg4[%c0_6, %c0_7] : memref<1x64xf32, #tpu.memory_space<vmem>>, vector<1x64xf32>
    %253 = vector.broadcast %252 : vector<1x64xf32> to vector<16x64xf32>
    %254 = arith.addf %251, %253 : vector<16x64xf32>
    %cst_8 = arith.constant 5.000000e-01 : f32
    %255 = vector.broadcast %cst_8 : f32 to vector<16x64xf32>
    %256 = arith.mulf %255, %254 : vector<16x64xf32>
    %cst_9 = arith.constant 0.707106769 : f32
    %257 = vector.broadcast %cst_9 : f32 to vector<16x64xf32>
    %258 = arith.mulf %254, %257 : vector<16x64xf32>
    %259 = math.erf %258 : vector<16x64xf32>
    %cst_10 = arith.constant 1.000000e+00 : f32
    %260 = vector.broadcast %cst_10 : f32 to vector<16x64xf32>
    %261 = arith.addf %260, %259 : vector<16x64xf32>
    %262 = arith.mulf %256, %261 : vector<16x64xf32>
    %c0_11 = arith.constant 0 : index
    %c0_12 = arith.constant 0 : index
    %263 = vector.load %arg5[%c0_11, %c0_12] : memref<64x128xf32, #tpu.memory_space<vmem>>, vector<64x128xf32>
    %cst_13 = arith.constant dense<0.000000e+00> : vector<16x128xf32>
    %264 = tpu.matmul %262, %263, %cst_13 {dimension_numbers = #tpu.dot_dimension_numbers<[1], [0], [0], [1], [0, 0, 1, 1], [], []>} : vector<16x64xf32>, vector<64x128xf32>, vector<16x128xf32> -> vector<16x128xf32>
    %c0_14 = arith.constant 0 : index
    %c0_15 = arith.constant 0 : index
    %265 = vector.load %arg6[%c0_14, %c0_15] : memref<1x128xf32, #tpu.memory_space<vmem>>, vector<1x128xf32>
    %266 = vector.broadcast %265 : vector<1x128xf32> to vector<16x128xf32>
    %267 = arith.mulf %264, %266 : vector<16x128xf32>
    %c0_16 = arith.constant 0 : index
    %c0_17 = arith.constant 0 : index
    %268 = vector.load %arg7[%c0_16, %c0_17] : memref<1x128xf32, #tpu.memory_space<vmem>>, vector<1x128xf32>
    %269 = vector.broadcast %268 : vector<1x128xf32> to vector<16x128xf32>
    %270 = arith.addf %267, %269 : vector<16x128xf32>
    %cst_18 = arith.constant 5.000000e-01 : f32
    %271 = vector.broadcast %cst_18 : f32 to vector<16x128xf32>
    %272 = arith.mulf %271, %270 : vector<16x128xf32>
    %cst_19 = arith.constant 0.707106769 : f32
    %273 = vector.broadcast %cst_19 : f32 to vector<16x128xf32>
    %274 = arith.mulf %270, %273 : vector<16x128xf32>
    %275 = math.erf %274 : vector<16x128xf32>
    %cst_20 = arith.constant 1.000000e+00 : f32
    %276 = vector.broadcast %cst_20 : f32 to vector<16x128xf32>
    %277 = arith.addf %276, %275 : vector<16x128xf32>
    %278 = arith.mulf %272, %277 : vector<16x128xf32>
    %c0_21 = arith.constant 0 : index
    %c0_22 = arith.constant 0 : index
    %c0_23 = arith.constant 0 : index
    %279 = vector.load %arg8[%c0_21, %c0_22, %c0_23] : memref<1x16x128xf32, #tpu.memory_space<vmem>>, vector<1x16x128xf32>
    %280 = vector.shape_cast %279 : vector<1x16x128xf32> to vector<16x128xf32>
    %281 = vector.shape_cast %278 : vector<16x128xf32> to vector<1x16x128xf32>
    tpu.vector_store %arg8[%c0_21, %c0_22, %c0_23], %281 {strides = array<i32>} : memref<1x16x128xf32, #tpu.memory_space<vmem>>, vector<1x16x128xf32>,
    return
  }
  func.func @transform_0(%arg0: i32) -> (i32, i32, i32) {
    %c0_i32 = arith.constant 0 : i32
    %c0_i32_0 = arith.constant 0 : i32
    %c0_i32_1 = arith.constant 0 : i32
    return %arg0, %c0_i32, %c0_i32_0 : i32, i32, i32
  }
  func.func @transform_1(%arg0: i32) -> (i32, i32) {
    %c0_i32 = arith.constant 0 : i32
    %c0_i32_0 = arith.constant 0 : i32
    %c0_i32_1 = arith.constant 0 : i32
    return %c0_i32, %c0_i32_0 : i32, i32
  }
  func.func @transform_2(%arg0: i32) -> (i32, i32) {
    %c0_i32 = arith.constant 0 : i32
    %c0_i32_0 = arith.constant 0 : i32
    %c0_i32_1 = arith.constant 0 : i32
    return %c0_i32, %c0_i32_0 : i32, i32
  }
  func.func @transform_3(%arg0: i32) -> (i32, i32) {
    %c0_i32 = arith.constant 0 : i32
    %c0_i32_0 = arith.constant 0 : i32
    %c0_i32_1 = arith.constant 0 : i32
    return %c0_i32, %c0_i32_0 : i32, i32
  }
  func.func @transform_4(%arg0: i32) -> (i32, i32) {
    %c0_i32 = arith.constant 0 : i32
    %c0_i32_0 = arith.constant 0 : i32
    %c0_i32_1 = arith.constant 0 : i32
    return %c0_i32, %c0_i32_0 : i32, i32
  }
  func.func @transform_5(%arg0: i32) -> (i32, i32) {
    %c0_i32 = arith.constant 0 : i32
    %c0_i32_0 = arith.constant 0 : i32
    %c0_i32_1 = arith.constant 0 : i32
    return %c0_i32, %c0_i32_0 : i32, i32
  }
  func.func @transform_6(%arg0: i32) -> (i32, i32) {
    %c0_i32 = arith.constant 0 : i32
    %c0_i32_0 = arith.constant 0 : i32
    %c0_i32_1 = arith.constant 0 : i32
    return %c0_i32, %c0_i32_0 : i32, i32
  }
  func.func @transform_7(%arg0: i32) -> (i32, i32, i32) {
    %c0_i32 = arith.constant 0 : i32
    %c0_i32_0 = arith.constant 0 : i32
    %c0_i32_1 = arith.constant 0 : i32
    return %arg0, %c0_i32, %c0_i32_0 : i32, i32, i32
  }
}

</mosaic_0001>

<llo_original>
// kernel: tile.31
$region0: #{tile.31}
  #allocation0 [shape = 's32[1]{0}', space=sflag, size = 0x4, scoped, tag = 'scoped memory for tile.31']
  %s0 = inlined_call_operand.vmem [shape: f32[4], index: 0, kind: input, shape index: {}]
  %s1 = inlined_call_operand.vmem [shape: f32[16,4], index: 1, kind: output, shape index: {}]
  // Predicated region
  $region2: #{tile.31} parent=0 // pred_check
    _
  $region3: #{tile.31} parent=0 // pred_check_branch
    %3 = sbr.rel (0) target = $region5
  $region4: #{tile.31} parent=0 // pred_region
    _
  $region5: #{tile.31} parent=0 // pred_fallthru
    _
  %v4 = vld [vmem:[%s0] ss:$0 sm:$0xff]
  %5 = vst [vmem:[%s1] sm:$0xff] %v4
  %s6 = scalar_lea.vmem %s1, 8
  %7 = vst [vmem:[%s6] sm:$0xff] %v4

// kernel: tile.32
$region0: #{tile.32}
  %s0 = inlined_call_operand.vmem [shape: f32[16,4], index: 0, kind: input, shape index: {}]
  %s1 = inlined_call_operand.vmem [shape: f32[1,64], index: 1, kind: output, shape index: {}]
  $region1: #{tile.32} parent=0
    #allocation0 [shape = 'u8[4096]{0}', space=vmem, size = 0x1000, scoped, tag = 'scoped mem for output reshape']
    %v2 = vld [vmem:[%s0] sm:$0x1]
    %vm3 = vcmask 31744
    %4 = vst.msk [vmem:[#allocation0] sm:$0x1] %vm3, %v2
    %s5 = scalar_lea.vmem %s0, 15
    %v6 = vld [vmem:[%s5] sm:$0x1]
    %7 = vrot.lane.b32.xlu0 %v6, 60
    %v8 = vpop.permute.xlu0 %7
    %vm9 = vcmask 523744
    %10 = vst.msk [vmem:[#allocation0] sm:$0x1] %vm9, %v8
    %s11 = scalar_lea.vmem %s0, 14
    %v12 = vld [vmem:[%s11] sm:$0x1]
    %13 = vrot.lane.b32.xlu0 %v12, 56
    %v14 = vpop.permute.xlu0 %13
    %vm15 = vcmask 490944
    %16 = vst.msk [vmem:[#allocation0] sm:$0x1] %vm15, %v14
    %s17 = scalar_lea.vmem %s0, 13
    %v18 = vld [vmem:[%s17] sm:$0x1]
    %19 = vrot.lane.b32.xlu0 %v18, 52
    %v20 = vpop.permute.xlu0 %19
    %vm21 = vcmask 458144
    %22 = vst.msk [vmem:[#allocation0] sm:$0x1] %vm21, %v20
    %s23 = scalar_lea.vmem %s0, 12
    %v24 = vld [vmem:[%s23] sm:$0x1]
    %25 = vrot.lane.b32.xlu0 %v24, 48
    %v26 = vpop.permute.xlu0 %25
    %vm27 = vcmask 425344
    %28 = vst.msk [vmem:[#allocation0] sm:$0x1] %vm27, %v26
    %s29 = scalar_lea.vmem %s0, 11
    %v30 = vld [vmem:[%s29] sm:$0x1]
    %31 = vrot.lane.b32.xlu0 %v30, 44
    %v32 = vpop.permute.xlu0 %31
    %vm33 = vcmask 392544
    %34 = vst.msk [vmem:[#allocation0] sm:$0x1] %vm33, %v32
    %s35 = scalar_lea.vmem %s0, 10
    %v36 = vld [vmem:[%s35] sm:$0x1]
    %37 = vrot.lane.b32.xlu0 %v36, 40
    %v38 = vpop.permute.xlu0 %37
    %vm39 = vcmask 359744
    %40 = vst.msk [vmem:[#allocation0] sm:$0x1] %vm39, %v38
    %s41 = scalar_lea.vmem %s0, 9
    %v42 = vld [vmem:[%s41] sm:$0x1]
    %43 = vrot.lane.b32.xlu0 %v42, 36
    %v44 = vpop.permute.xlu0 %43
    %vm45 = vcmask 326944
    %46 = vst.msk [vmem:[#allocation0] sm:$0x1] %vm45, %v44
    %s47 = scalar_lea.vmem %s0, 8
    %v48 = vld [vmem:[%s47] sm:$0x1]
    %49 = vrot.lane.b32.xlu0 %v48, 32
    %v50 = vpop.permute.xlu0 %49
    %vm51 = vcmask 294144
    %52 = vst.msk [vmem:[#allocation0] sm:$0x1] %vm51, %v50
    %s53 = scalar_lea.vmem %s0, 7
    %v54 = vld [vmem:[%s53] sm:$0x1]
    %55 = vrot.lane.b32.xlu0 %v54, 28
    %v56 = vpop.permute.xlu0 %55
    %vm57 = vcmask 261344
    %58 = vst.msk [vmem:[#allocation0] sm:$0x1] %vm57, %v56
    %s59 = scalar_lea.vmem %s0, 6
    %v60 = vld [vmem:[%s59] sm:$0x1]
    %61 = vrot.lane.b32.xlu0 %v60, 24
    %v62 = vpop.permute.xlu0 %61
    %vm63 = vcmask 228544
    %64 = vst.msk [vmem:[#allocation0] sm:$0x1] %vm63, %v62
    %s65 = scalar_lea.vmem %s0, 5
    %v66 = vld [vmem:[%s65] sm:$0x1]
    %67 = vrot.lane.b32.xlu0 %v66, 20
    %v68 = vpop.permute.xlu0 %67
    %vm69 = vcmask 195744
    %70 = vst.msk [vmem:[#allocation0] sm:$0x1] %vm69, %v68
    %s71 = scalar_lea.vmem %s0, 4
    %v72 = vld [vmem:[%s71] sm:$0x1]
    %73 = vrot.lane.b32.xlu0 %v72, 16
    %v74 = vpop.permute.xlu0 %73
    %vm75 = vcmask 162944
    %76 = vst.msk [vmem:[#allocation0] sm:$0x1] %vm75, %v74
    %s77 = scalar_lea.vmem %s0, 3
    %v78 = vld [vmem:[%s77] sm:$0x1]
    %79 = vrot.lane.b32.xlu0 %v78, 12
    %v80 = vpop.permute.xlu0 %79
    %vm81 = vcmask 130144
    %82 = vst.msk [vmem:[#allocation0] sm:$0x1] %vm81, %v80
    %s83 = scalar_lea.vmem %s0, 2
    %v84 = vld [vmem:[%s83] sm:$0x1]
    %85 = vrot.lane.b32.xlu0 %v84, 8
    %v86 = vpop.permute.xlu0 %85
    %vm87 = vcmask 97344
    %88 = vst.msk [vmem:[#allocation0] sm:$0x1] %vm87, %v86
    %s89 = scalar_lea.vmem %s0, 1
    %v90 = vld [vmem:[%s89] sm:$0x1]
    %91 = vrot.lane.b32.xlu0 %v90, 4
    %v92 = vpop.permute.xlu0 %91
    %vm93 = vcmask 64544
    %94 = vst.msk [vmem:[#allocation0] sm:$0x1] %vm93, %v92
    %s96 = sshllo.u32 0, 1
    %v98 = vld [vmem:[#allocation0] sm:%s96]
    %s99 = sshllo.u32 0, 1
    %100 = vst [vmem:[%s1] sm:%s99] %v98

// kernel: tile.41
$region0: #{tile.41}
  #allocation0 [shape = 's32[1]{0}', space=sflag, size = 0x4, scoped, tag = 'scoped memory for tile.41']
  %s0 = inlined_call_operand.vmem [shape: f32[8], index: 0, kind: input, shape index: {}]
  %s1 = inlined_call_operand.vmem [shape: f32[16,8], index: 1, kind: output, shape index: {}]
  // Predicated region
  $region2: #{tile.41} parent=0 // pred_check
    _
  $region3: #{tile.41} parent=0 // pred_check_branch
    %3 = sbr.rel (0) target = $region5
  $region4: #{tile.41} parent=0 // pred_region
    _
  $region5: #{tile.41} parent=0 // pred_fallthru
    _
  %v4 = vld [vmem:[%s0] ss:$0 sm:$0xff]
  %5 = vst [vmem:[%s1] sm:$0xff] %v4
  %s6 = scalar_lea.vmem %s1, 8
  %7 = vst [vmem:[%s6] sm:$0xff] %v4

// kernel: tile.42
$region0: #{tile.42}
  %s0 = inlined_call_operand.vmem [shape: f32[16,8], index: 0, kind: input, shape index: {}]
  %s1 = inlined_call_operand.vmem [shape: f32[1,128], index: 1, kind: output, shape index: {}]
  $region1: #{tile.42} parent=0
    #allocation0 [shape = 'u8[4096]{0}', space=vmem, size = 0x1000, scoped, tag = 'scoped mem for output reshape']
    %v2 = vld [vmem:[%s0] sm:$0x1]
    %vm3 = vcmask 64512
    %4 = vst.msk [vmem:[#allocation0] sm:$0x1] %vm3, %v2
    %s5 = scalar_lea.vmem %s0, 15
    %v6 = vld [vmem:[%s5] sm:$0x1]
    %7 = vrot.lane.b32.xlu0 %v6, 120
    %v8 = vpop.permute.xlu0 %7
    %vm9 = vcmask 1048512
    %10 = vst.msk [vmem:[#allocation0] sm:$0x1] %vm9, %v8
    %s11 = scalar_lea.vmem %s0, 14
    %v12 = vld [vmem:[%s11] sm:$0x1]
    %13 = vrot.lane.b32.xlu0 %v12, 112
    %v14 = vpop.permute.xlu0 %13
    %vm15 = vcmask 982912
    %16 = vst.msk [vmem:[#allocation0] sm:$0x1] %vm15, %v14
    %s17 = scalar_lea.vmem %s0, 13
    %v18 = vld [vmem:[%s17] sm:$0x1]
    %19 = vrot.lane.b32.xlu0 %v18, 104
    %v20 = vpop.permute.xlu0 %19
    %vm21 = vcmask 917312
    %22 = vst.msk [vmem:[#allocation0] sm:$0x1] %vm21, %v20
    %s23 = scalar_lea.vmem %s0, 12
    %v24 = vld [vmem:[%s23] sm:$0x1]
    %25 = vrot.lane.b32.xlu0 %v24, 96
    %v26 = vpop.permute.xlu0 %25
    %vm27 = vcmask 851712
    %28 = vst.msk [vmem:[#allocation0] sm:$0x1] %vm27, %v26
    %s29 = scalar_lea.vmem %s0, 11
    %v30 = vld [vmem:[%s29] sm:$0x1]
    %31 = vrot.lane.b32.xlu0 %v30, 88
    %v32 = vpop.permute.xlu0 %31
    %vm33 = vcmask 786112
    %34 = vst.msk [vmem:[#allocation0] sm:$0x1] %vm33, %v32
    %s35 = scalar_lea.vmem %s0, 10
    %v36 = vld [vmem:[%s35] sm:$0x1]
    %37 = vrot.lane.b32.xlu0 %v36, 80
    %v38 = vpop.permute.xlu0 %37
    %vm39 = vcmask 720512
    %40 = vst.msk [vmem:[#allocation0] sm:$0x1] %vm39, %v38
    %s41 = scalar_lea.vmem %s0, 9
    %v42 = vld [vmem:[%s41] sm:$0x1]
    %43 = vrot.lane.b32.xlu0 %v42, 72
    %v44 = vpop.permute.xlu0 %43
    %vm45 = vcmask 654912
    %46 = vst.msk [vmem:[#allocation0] sm:$0x1] %vm45, %v44
    %s47 = scalar_lea.vmem %s0, 8
    %v48 = vld [vmem:[%s47] sm:$0x1]
    %49 = vrot.lane.b32.xlu0 %v48, 64
    %v50 = vpop.permute.xlu0 %49
    %vm51 = vcmask 589312
    %52 = vst.msk [vmem:[#allocation0] sm:$0x1] %vm51, %v50
    %s53 = scalar_lea.vmem %s0, 7
    %v54 = vld [vmem:[%s53] sm:$0x1]
    %55 = vrot.lane.b32.xlu0 %v54, 56
    %v56 = vpop.permute.xlu0 %55
    %vm57 = vcmask 523712
    %58 = vst.msk [vmem:[#allocation0] sm:$0x1] %vm57, %v56
    %s59 = scalar_lea.vmem %s0, 6
    %v60 = vld [vmem:[%s59] sm:$0x1]
    %61 = vrot.lane.b32.xlu0 %v60, 48
    %v62 = vpop.permute.xlu0 %61
    %vm63 = vcmask 458112
    %64 = vst.msk [vmem:[#allocation0] sm:$0x1] %vm63, %v62
    %s65 = scalar_lea.vmem %s0, 5
    %v66 = vld [vmem:[%s65] sm:$0x1]
    %67 = vrot.lane.b32.xlu0 %v66, 40
    %v68 = vpop.permute.xlu0 %67
    %vm69 = vcmask 392512
    %70 = vst.msk [vmem:[#allocation0] sm:$0x1] %vm69, %v68
    %s71 = scalar_lea.vmem %s0, 4
    %v72 = vld [vmem:[%s71] sm:$0x1]
    %73 = vrot.lane.b32.xlu0 %v72, 32
    %v74 = vpop.permute.xlu0 %73
    %vm75 = vcmask 326912
    %76 = vst.msk [vmem:[#allocation0] sm:$0x1] %vm75, %v74
    %s77 = scalar_lea.vmem %s0, 3
    %v78 = vld [vmem:[%s77] sm:$0x1]
    %79 = vrot.lane.b32.xlu0 %v78, 24
    %v80 = vpop.permute.xlu0 %79
    %vm81 = vcmask 261312
    %82 = vst.msk [vmem:[#allocation0] sm:$0x1] %vm81, %v80
    %s83 = scalar_lea.vmem %s0, 2
    %v84 = vld [vmem:[%s83] sm:$0x1]
    %85 = vrot.lane.b32.xlu0 %v84, 16
    %v86 = vpop.permute.xlu0 %85
    %vm87 = vcmask 195712
    %88 = vst.msk [vmem:[#allocation0] sm:$0x1] %vm87, %v86
    %s89 = scalar_lea.vmem %s0, 1
    %v90 = vld [vmem:[%s89] sm:$0x1]
    %91 = vrot.lane.b32.xlu0 %v90, 8
    %v92 = vpop.permute.xlu0 %91
    %vm93 = vcmask 130112
    %94 = vst.msk [vmem:[#allocation0] sm:$0x1] %vm93, %v92
    %s96 = sshllo.u32 0, 1
    %v98 = vld [vmem:[#allocation0] sm:%s96]
    %s99 = sshllo.u32 0, 1
    %100 = vst [vmem:[%s1] sm:%s99] %v98

// kernel: dwconv_forward.1
$region0: #{dwconv_forward.1}
  #allocation0 [shape = 'u32[]', space=smem, size = 0x4, offset = 0x4, fixed_abs, tag = 'smem constant byte address 0x4 - core index']
  #allocation1 [shape = 'u32[144,128]{1,0:T(1,128)}', space=vmem, size = 0x12000, scoped, tag = 'internal scratch']
  %s0 = inlined_call_operand.vmem [shape: f32[2,22,88], index: 0, kind: input, shape index: {}]
  %s1 = inlined_call_operand.vmem [shape: f32[49,64], index: 1, kind: input, shape index: {}]
  %s2 = inlined_call_operand.vmem [shape: f32[1,64], index: 2, kind: input, shape index: {}]
  %s3 = inlined_call_operand.vmem [shape: f32[1,64], index: 3, kind: input, shape index: {}]
  %s4 = inlined_call_operand.vmem [shape: f32[64,128], index: 4, kind: input, shape index: {}]
  %s5 = inlined_call_operand.vmem [shape: f32[1,128], index: 5, kind: input, shape index: {}]
  %s6 = inlined_call_operand.vmem [shape: f32[1,128], index: 6, kind: input, shape index: {}]
  %s7 = inlined_call_operand.vmem [shape: f32[2,16,128], index: 7, kind: output, shape index: {}]
  %s8 = sld [smem:[#allocation0]]
  $region61: #{dwconv_forward.1} parent=0
    _
  %s10 = ssub.s32 1, %s8
  %s11 = scalar_select 0, %s10, %s8
  loop: start=0, step=1, limit=4
  $region2: #{dwconv_forward.1} parent=0 // loop_pre_header
    _
  $region3: #{dwconv_forward.1} parent=0 // loop_header
    %s13 = sphi 0, %s17
    %p14 = scmp.ge.s32.totalorder %s13, 4
    %s23 = sphi 0, %s25
    %s26 = sphi 0, %s23
    %s27 = sphi 0, %s26
    %s43 = sphi 0, %s27
    %s47 = sphi 0, %s47
    %s49 = sphi 0, %s47
    %s50 = sphi 0, %s49
    %s64 = sphi 0, %s50
    %s68 = sphi 0, %s68
    %s70 = sphi 0, %s68
    %s71 = sphi 0, %s70
    %s85 = sphi 0, %s71
    %s89 = sphi 0, %s89
    %s91 = sphi 0, %s89
    %s92 = sphi 0, %s91
    %s106 = sphi 0, %s92
    %s110 = sphi 0, %s110
    %s112 = sphi 0, %s110
    %s113 = sphi 0, %s112
    %s127 = sphi 0, %s113
    %s131 = sphi 0, %s131
    %s133 = sphi 0, %s131
    %s134 = sphi 0, %s133
    %s148 = sphi 0, %s134
    %s152 = sphi 0, %s152
    %s154 = sphi 0, %s152
    %s155 = sphi 0, %s154
    %s169 = sphi 0, %s155
    %s175 = sphi 0, %s177
    %s178 = sphi 0, %s175
    %s179 = sphi 0, %s178
    %s195 = sphi 0, %s179
  $region4: #{dwconv_forward.1} parent=0 // loop_header_branch
    %16 = sbr.rel (%p14) target = $region8
  $region5: #{dwconv_forward.1} parent=0 // loop_body
    %s18 = ssub.s32 %s13, 1
    %s19 = ssub.s32 %s13, 2
    %s20 = sadd.s32 %s13, 1
    %s21 = ssub.s32 %s13, %s20
    %p22 = scmp.eq.s32.totalorder %s21, 0
    %s24 = sadd.s32 %s23, 1
    %s25 = scalar_select %p22, %s23, %s24
    %p28 = pneg %p22
    %p29 = scmp.eq.s32.totalorder %s13, 1
    %p30 = por %p28, %p29
    %p31 = scmp.ne.s32.totalorder %s23, %s26
    %p32 = scmp.eq.s32.totalorder %s13, 0
    %p33 = por %p31, %p32
    %p34 = scmp.ne.s32.totalorder %s23, %s26
    %p35 = scmp.eq.s32.totalorder %s18, 1
    %p36 = por %p34, %p35
    %p37 = scmp.ne.s32.totalorder %s26, %s27
    %p38 = scmp.eq.s32.totalorder %s18, 0
    %p39 = por %p37, %p38
    %p40 = scmp.ne.s32.totalorder %s26, %s27
    %p41 = scmp.eq.s32.totalorder %s19, 1
    %p42 = por %p40, %p41
    %p44 = scmp.ne.s32.totalorder %s27, %s43
    %p45 = scmp.eq.s32.totalorder %s19, 0
    %p46 = por %p44, %p45
    %s48 = sadd.s32 %s47, 1
    %p51 = scmp.eq.s32.totalorder %s13, 1
    %p52 = scmp.ne.s32.totalorder %s47, %s49
    %p53 = scmp.eq.s32.totalorder %s13, 0
    %p54 = por %p52, %p53
    %p55 = scmp.ne.s32.totalorder %s47, %s49
    %p56 = scmp.eq.s32.totalorder %s18, 1
    %p57 = por %p55, %p56
    %p58 = scmp.ne.s32.totalorder %s49, %s50
    %p59 = scmp.eq.s32.totalorder %s18, 0
    %p60 = por %p58, %p59
    %p61 = scmp.ne.s32.totalorder %s49, %s50
    %p62 = scmp.eq.s32.totalorder %s19, 1
    %p63 = por %p61, %p62
    %p65 = scmp.ne.s32.totalorder %s50, %s64
    %p66 = scmp.eq.s32.totalorder %s19, 0
    %p67 = por %p65, %p66
    %s69 = sadd.s32 %s68, 1
    %p72 = scmp.eq.s32.totalorder %s13, 1
    %p73 = scmp.ne.s32.totalorder %s68, %s70
    %p74 = scmp.eq.s32.totalorder %s13, 0
    %p75 = por %p73, %p74
    %p76 = scmp.ne.s32.totalorder %s68, %s70
    %p77 = scmp.eq.s32.totalorder %s18, 1
    %p78 = por %p76, %p77
    %p79 = scmp.ne.s32.totalorder %s70, %s71
    %p80 = scmp.eq.s32.totalorder %s18, 0
    %p81 = por %p79, %p80
    %p82 = scmp.ne.s32.totalorder %s70, %s71
    %p83 = scmp.eq.s32.totalorder %s19, 1
    %p84 = por %p82, %p83
    %p86 = scmp.ne.s32.totalorder %s71, %s85
    %p87 = scmp.eq.s32.totalorder %s19, 0
    %p88 = por %p86, %p87
    %s90 = sadd.s32 %s89, 1
    %p93 = scmp.eq.s32.totalorder %s13, 1
    %p94 = scmp.ne.s32.totalorder %s89, %s91
    %p95 = scmp.eq.s32.totalorder %s13, 0
    %p96 = por %p94, %p95
    %p97 = scmp.ne.s32.totalorder %s89, %s91
    %p98 = scmp.eq.s32.totalorder %s18, 1
    %p99 = por %p97, %p98
    %p100 = scmp.ne.s32.totalorder %s91, %s92
    %p101 = scmp.eq.s32.totalorder %s18, 0
    %p102 = por %p100, %p101
    %p103 = scmp.ne.s32.totalorder %s91, %s92
    %p104 = scmp.eq.s32.totalorder %s19, 1
    %p105 = por %p103, %p104
    %p107 = scmp.ne.s32.totalorder %s92, %s106
    %p108 = scmp.eq.s32.totalorder %s19, 0
    %p109 = por %p107, %p108
    %s111 = sadd.s32 %s110, 1
    %p114 = scmp.eq.s32.totalorder %s13, 1
    %p115 = scmp.ne.s32.totalorder %s110, %s112
    %p116 = scmp.eq.s32.totalorder %s13, 0
    %p117 = por %p115, %p116
    %p118 = scmp.ne.s32.totalorder %s110, %s112
    %p119 = scmp.eq.s32.totalorder %s18, 1
    %p120 = por %p118, %p119
    %p121 = scmp.ne.s32.totalorder %s112, %s113
    %p122 = scmp.eq.s32.totalorder %s18, 0
    %p123 = por %p121, %p122
    %p124 = scmp.ne.s32.totalorder %s112, %s113
    %p125 = scmp.eq.s32.totalorder %s19, 1
    %p126 = por %p124, %p125
    %p128 = scmp.ne.s32.totalorder %s113, %s127
    %p129 = scmp.eq.s32.totalorder %s19, 0
    %p130 = por %p128, %p129
    %s132 = sadd.s32 %s131, 1
    %p135 = scmp.eq.s32.totalorder %s13, 1
    %p136 = scmp.ne.s32.totalorder %s131, %s133
    %p137 = scmp.eq.s32.totalorder %s13, 0
    %p138 = por %p136, %p137
    %p139 = scmp.ne.s32.totalorder %s131, %s133
    %p140 = scmp.eq.s32.totalorder %s18, 1
    %p141 = por %p139, %p140
    %p142 = scmp.ne.s32.totalorder %s133, %s134
    %p143 = scmp.eq.s32.totalorder %s18, 0
    %p144 = por %p142, %p143
    %p145 = scmp.ne.s32.totalorder %s133, %s134
    %p146 = scmp.eq.s32.totalorder %s19, 1
    %p147 = por %p145, %p146
    %p149 = scmp.ne.s32.totalorder %s134, %s148
    %p150 = scmp.eq.s32.totalorder %s19, 0
    %p151 = por %p149, %p150
    %s153 = sadd.s32 %s152, 1
    %p156 = scmp.eq.s32.totalorder %s13, 1
    %p157 = scmp.ne.s32.totalorder %s152, %s154
    %p158 = scmp.eq.s32.totalorder %s13, 0
    %p159 = por %p157, %p158
    %p160 = scmp.ne.s32.totalorder %s152, %s154
    %p161 = scmp.eq.s32.totalorder %s18, 1
    %p162 = por %p160, %p161
    %p163 = scmp.ne.s32.totalorder %s154, %s155
    %p164 = scmp.eq.s32.totalorder %s18, 0
    %p165 = por %p163, %p164
    %p166 = scmp.ne.s32.totalorder %s154, %s155
    %p167 = scmp.eq.s32.totalorder %s19, 1
    %p168 = por %p166, %p167
    %p170 = scmp.ne.s32.totalorder %s155, %s169
    %p171 = scmp.eq.s32.totalorder %s19, 0
    %p172 = por %p170, %p171
    %s173 = ssub.s32 %s13, %s20
    %p174 = scmp.eq.s32.totalorder %s173, 0
    %s176 = sadd.s32 %s175, 1
    %s177 = scalar_select %p174, %s175, %s176
    %p180 = pneg %p174
    %p181 = scmp.eq.s32.totalorder %s13, 1
    %p182 = por %p180, %p181
    %p183 = scmp.ne.s32.totalorder %s175, %s178
    %p184 = scmp.eq.s32.totalorder %s13, 0
    %p185 = por %p183, %p184
    %p186 = scmp.ne.s32.totalorder %s175, %s178
    %p187 = scmp.eq.s32.totalorder %s18, 1
    %p188 = por %p186, %p187
    %p189 = scmp.ne.s32.totalorder %s178, %s179
    %p190 = scmp.eq.s32.totalorder %s18, 0
    %p191 = por %p189, %p190
    %p192 = scmp.ne.s32.totalorder %s178, %s179
    %p193 = scmp.eq.s32.totalorder %s19, 1
    %p194 = por %p192, %p193
    %p196 = scmp.ne.s32.totalorder %s179, %s195
    %p197 = scmp.eq.s32.totalorder %s19, 0
    %p198 = por %p196, %p197
    %p199 = scmp.le.s32.totalorder 1, %s13
    %p200 = scmp.lt.s32.totalorder %s13, 3
    %p201 = pnand %p199, %p200
    %p202 = pneg %p201
    // Predicated region
    $region9: #{dwconv_forward.1} parent=5 // pred_check
      _
    $region10: #{dwconv_forward.1} parent=5 // pred_check_branch
      %204 = sbr.rel (%p201) target = $region12
    $region11: #{dwconv_forward.1} parent=5 // pred_region
      %s205 = ssub.s32 %s13, 1
      // Predicated region
      $region13: #{dwconv_forward.1} parent=11 // pred_check
        %p206 = pneg %p60
      $region14: #{dwconv_forward.1} parent=11 // pred_check_branch
        %208 = sbr.rel (%p206) target = $region16
      $region15: #{dwconv_forward.1} parent=11 // pred_region
        _
      $region16: #{dwconv_forward.1} parent=11 // pred_fallthru
        _
      // Predicated region
      $region17: #{dwconv_forward.1} parent=11 // pred_check
        %p209 = pneg %p81
      $region18: #{dwconv_forward.1} parent=11 // pred_check_branch
        %211 = sbr.rel (%p209) target = $region20
      $region19: #{dwconv_forward.1} parent=11 // pred_region
        _
      $region20: #{dwconv_forward.1} parent=11 // pred_fallthru
        _
      // Predicated region
      $region21: #{dwconv_forward.1} parent=11 // pred_check
        %p212 = pneg %p102
      $region22: #{dwconv_forward.1} parent=11 // pred_check_branch
        %214 = sbr.rel (%p212) target = $region24
      $region23: #{dwconv_forward.1} parent=11 // pred_region
        _
      $region24: #{dwconv_forward.1} parent=11 // pred_fallthru
        _
      // Predicated region
      $region25: #{dwconv_forward.1} parent=11 // pred_check
        %p215 = pneg %p123
      $region26: #{dwconv_forward.1} parent=11 // pred_check_branch
        %217 = sbr.rel (%p215) target = $region28
      $region27: #{dwconv_forward.1} parent=11 // pred_region
        _
      $region28: #{dwconv_forward.1} parent=11 // pred_fallthru
        _
      // Predicated region
      $region29: #{dwconv_forward.1} parent=11 // pred_check
        %p218 = pneg %p144
      $region30: #{dwconv_forward.1} parent=11 // pred_check_branch
        %220 = sbr.rel (%p218) target = $region32
      $region31: #{dwconv_forward.1} parent=11 // pred_region
        _
      $region32: #{dwconv_forward.1} parent=11 // pred_fallthru
        _
      // Predicated region
      $region33: #{dwconv_forward.1} parent=11 // pred_check
        %p221 = pneg %p165
      $region34: #{dwconv_forward.1} parent=11 // pred_check_branch
        %223 = sbr.rel (%p221) target = $region36
      $region35: #{dwconv_forward.1} parent=11 // pred_region
        _
      $region36: #{dwconv_forward.1} parent=11 // pred_fallthru
        _
    $region12: #{dwconv_forward.1} parent=5 // pred_fallthru
      _
    %p224 = scmp.lt.s32.totalorder %s13, 2
    // Predicated region
    $region37: #{dwconv_forward.1} parent=5 // pred_check
      %p225 = pneg %p224
    $region38: #{dwconv_forward.1} parent=5 // pred_check_branch
      %227 = sbr.rel (%p225) target = $region40
    $region39: #{dwconv_forward.1} parent=5 // pred_region
      // Predicated region
      $region41: #{dwconv_forward.1} parent=39 // pred_check
        %p228 = pneg %p33
      $region42: #{dwconv_forward.1} parent=39 // pred_check_branch
        %230 = sbr.rel (%p228) target = $region44
      $region43: #{dwconv_forward.1} parent=39 // pred_region
        %p231 = scmp.lt.s32.totalorder %s13, 1
        %s232 = scalar_select %p231, %s13, 1
        %s233 = smul.addr %s232, 3
        %s234 = smul.addr %s233, 8
        %s235 = scalar_lea.vmem %s0, %s234
      $region44: #{dwconv_forward.1} parent=39 // pred_fallthru
        _
    $region40: #{dwconv_forward.1} parent=5 // pred_fallthru
      _
    %p236 = scmp.le.s32.totalorder 1, %s13
    %p237 = scmp.lt.s32.totalorder %s13, 3
    %p238 = pnand %p236, %p237
    %p239 = pneg %p238
    // Predicated region
    $region45: #{dwconv_forward.1} parent=5 // pred_check
      _
    $region46: #{dwconv_forward.1} parent=5 // pred_check_branch
      %241 = sbr.rel (%p238) target = $region48
    $region47: #{dwconv_forward.1} parent=5 // pred_region
      %s242 = ssub.s32 %s13, 1
      %p243 = scmp.lt.s32.totalorder %s18, 1
      %s244 = scalar_select %p243, %s18, 1
      %s245 = smul.addr %s244, 3
      %s246 = smul.addr %s245, 8
      %s247 = scalar_lea.vmem %s0, %s246
      %p248 = pneg %p39
      %p249 = pneg %p36
      %p250 = pneg %p60
      %p251 = pneg %p57
      %p252 = pneg %p81
      %p253 = pneg %p78
      %p254 = pneg %p102
      %p255 = pneg %p99
      %p256 = pneg %p123
      %p257 = pneg %p120
      %p258 = pneg %p144
      %p259 = pneg %p141
      %p260 = pneg %p165
      %p261 = pneg %p162
      %p262 = pneg %p191
      %p263 = pneg %p188
      %p264 = scmp.lt.s32.totalorder %s18, 1
      %s265 = scalar_select %p264, %s18, 1
      %s266 = smul.addr %s265, 2
      %s267 = smul.addr %s266, 8
      %s268 = scalar_lea.vmem %s7, %s267
      %p269 = scmp.lt.s32.totalorder %s18, 1
      %s270 = scalar_select %p269, %s18, 1
      %s271 = smul.addr %s270, 3
      %s272 = smul.addr %s271, 8
      %s273 = scalar_lea.vmem %s0, %s272
      %p274 = scmp.lt.s32.totalorder %s18, 1
      %s275 = scalar_select %p274, %s18, 1
      %s276 = smul.addr %s275, 2
      %s277 = smul.addr %s276, 8
      %s278 = scalar_lea.vmem %s7, %s277
      %v279 = vld [vmem:[%s273] sm:$0xff]
      %v280 = vld [vmem:[%s273 + $0x8] sm:$0xff]
      %v281 = vld [vmem:[%s273 + $0x10] sm:$0x3f]
      %v282 = vld [vmem:[%s1] sm:$0xff]
      %v283 = vld [vmem:[%s1 + $0x8] sm:$0xff]
      %v284 = vld [vmem:[%s1 + $0x10] sm:$0xff]
      %v285 = vld [vmem:[%s1 + $0x18] sm:$0xff]
      %v286 = vld [vmem:[%s1 + $0x20] sm:$0xff]
      %v287 = vld [vmem:[%s1 + $0x28] sm:$0xff]
      %v288 = vld [vmem:[%s1 + $0x30] sm:$0x1]
      %v289 = vlaneseq
      %v290 = vshrl.u32 %v289, 7
      %v291 = vsub.s32 0, %v290
      %v292 = vrot.slane %v282, %v291
      %v293 = vmul.f32 %v279, %v292
      %v294 = vmul.f32 %v280, %v292
      %v295 = vadd.f32 %v293, 0.0
      %v296 = vadd.f32 %v294, 0.0
      %v297 = vlaneseq
      %v298 = vshrl.u32 %v297, 7
      %v299 = vsub.s32 1, %v298
      %v300 = vrot.slane %v282, %v299
      %302 = vrot.lane.b32.xlu0 %v300, 4
      %v303 = vpop.permute.xlu0 %302
      %v305 = vmul.f32 %v279, %v303
      %v306 = vmul.f32 %v280, %v303
      %309 = vrot.lane.b32.xlu0 %v305, 124
      %v310 = vpop.permute.xlu0 %309
      %311 = vrot.lane.b32.xlu0 %v306, 124
      %v312 = vpop.permute.xlu0 %311
      %v315 = vadd.f32 %v295, %v310
      %v316 = vadd.f32 %v296, %v312
      %v317 = vlaneseq
      %v318 = vshrl.u32 %v317, 7
      %v319 = vsub.s32 2, %v318
      %v320 = vrot.slane %v282, %v319
      %322 = vrot.lane.b32.xlu0 %v320, 8
      %v323 = vpop.permute.xlu0 %322
      %v325 = vmul.f32 %v279, %v323
      %v326 = vmul.f32 %v280, %v323
      %329 = vrot.lane.b32.xlu0 %v325, 120
      %v330 = vpop.permute.xlu0 %329
      %331 = vrot.lane.b32.xlu0 %v326, 120
      %v332 = vpop.permute.xlu0 %331
      %v335 = vadd.f32 %v315, %v330
      %v336 = vadd.f32 %v316, %v332
      %v337 = vlaneseq
      %v338 = vshrl.u32 %v337, 7
      %v339 = vsub.s32 3, %v338
      %v340 = vrot.slane %v282, %v339
      %342 = vrot.lane.b32.xlu0 %v340, 12
      %v343 = vpop.permute.xlu0 %342
      %v345 = vmul.f32 %v279, %v343
      %v346 = vmul.f32 %v280, %v343
      %349 = vrot.lane.b32.xlu0 %v345, 116
      %v350 = vpop.permute.xlu0 %349
      %351 = vrot.lane.b32.xlu0 %v346, 116
      %v352 = vpop.permute.xlu0 %351
      %v355 = vadd.f32 %v335, %v350
      %v356 = vadd.f32 %v336, %v352
      %v357 = vlaneseq
      %v358 = vshrl.u32 %v357, 7
      %v359 = vsub.s32 4, %v358
      %v360 = vrot.slane %v282, %v359
      %362 = vrot.lane.b32.xlu0 %v360, 16
      %v363 = vpop.permute.xlu0 %362
      %v365 = vmul.f32 %v279, %v363
      %v366 = vmul.f32 %v280, %v363
      %369 = vrot.lane.b32.xlu0 %v365, 112
      %v370 = vpop.permute.xlu0 %369
      %371 = vrot.lane.b32.xlu0 %v366, 112
      %v372 = vpop.permute.xlu0 %371
      %v375 = vadd.f32 %v355, %v370
      %v376 = vadd.f32 %v356, %v372
      %v377 = vlaneseq
      %v378 = vshrl.u32 %v377, 7
      %v379 = vsub.s32 5, %v378
      %v380 = vrot.slane %v282, %v379
      %382 = vrot.lane.b32.xlu0 %v380, 20
      %v383 = vpop.permute.xlu0 %382
      %v385 = vmul.f32 %v279, %v383
      %v386 = vmul.f32 %v280, %v383
      %389 = vrot.lane.b32.xlu0 %v385, 108
      %v390 = vpop.permute.xlu0 %389
      %391 = vrot.lane.b32.xlu0 %v386, 108
      %v392 = vpop.permute.xlu0 %391
      %v395 = vadd.f32 %v375, %v390
      %v396 = vadd.f32 %v376, %v392
      %v397 = vlaneseq
      %v398 = vshrl.u32 %v397, 7
      %v399 = vsub.s32 6, %v398
      %v400 = vrot.slane %v282, %v399
      %402 = vrot.lane.b32.xlu0 %v400, 24
      %v403 = vpop.permute.xlu0 %402
      %v405 = vmul.f32 %v279, %v403
      %v406 = vmul.f32 %v280, %v403
      %409 = vrot.lane.b32.xlu0 %v405, 104
      %v410 = vpop.permute.xlu0 %409
      %411 = vrot.lane.b32.xlu0 %v406, 104
      %v412 = vpop.permute.xlu0 %411
      %v415 = vadd.f32 %v395, %v410
      %v416 = vadd.f32 %v396, %v412
      %v417 = vlaneseq
      %v418 = vshrl.u32 %v417, 7
      %v419 = vsub.s32 7, %v418
      %v420 = vrot.slane %v282, %v419
      %v421 = vmul.f32 %v279, %v420
      %v422 = vmul.f32 %v280, %v420
      %v423 = vmul.f32 %v281, %v420
      %vm427 = vcmask 1046528
      %v428 = vrot.slane %v421, 1
      %v429 = vrot.slane %v422, 1
      %v430 = vsel %vm427, %v428, %v429
      %v431 = vrot.slane %v423, 1
      %v432 = vsel %vm427, %v429, %v431
      %v435 = vadd.f32 %v415, %v430
      %v436 = vadd.f32 %v416, %v432
      %v437 = vlaneseq
      %v438 = vshrl.u32 %v437, 7
      %v439 = vsub.s32 0, %v438
      %v440 = vrot.slane %v283, %v439
      %442 = vrot.lane.b32.xlu0 %v440, 4
      %v443 = vpop.permute.xlu0 %442
      %v445 = vmul.f32 %v279, %v443
      %v446 = vmul.f32 %v280, %v443
      %v447 = vmul.f32 %v281, %v443
      %v451 = vrot.slane %v445, 1
      %v452 = vrot.slane %v446, 1
      %v453 = vsel %vm427, %v451, %v452
      %v454 = vrot.slane %v447, 1
      %v455 = vsel %vm427, %v452, %v454
      %456 = vrot.lane.b32.xlu0 %v453, 124
      %v457 = vpop.permute.xlu0 %456
      %458 = vrot.lane.b32.xlu0 %v455, 124
      %v459 = vpop.permute.xlu0 %458
      %v462 = vadd.f32 %v435, %v457
      %v463 = vadd.f32 %v436, %v459
      %v464 = vlaneseq
      %v465 = vshrl.u32 %v464, 7
      %v466 = vsub.s32 1, %v465
      %v467 = vrot.slane %v283, %v466
      %469 = vrot.lane.b32.xlu0 %v467, 8
      %v470 = vpop.permute.xlu0 %469
      %v472 = vmul.f32 %v279, %v470
      %v473 = vmul.f32 %v280, %v470
      %v474 = vmul.f32 %v281, %v470
      %v478 = vrot.slane %v472, 1
      %v479 = vrot.slane %v473, 1
      %v480 = vsel %vm427, %v478, %v479
      %v481 = vrot.slane %v474, 1
      %v482 = vsel %vm427, %v479, %v481
      %483 = vrot.lane.b32.xlu0 %v480, 120
      %v484 = vpop.permute.xlu0 %483
      %485 = vrot.lane.b32.xlu0 %v482, 120
      %v486 = vpop.permute.xlu0 %485
      %v489 = vadd.f32 %v462, %v484
      %v490 = vadd.f32 %v463, %v486
      %v491 = vlaneseq
      %v492 = vshrl.u32 %v491, 7
      %v493 = vsub.s32 2, %v492
      %v494 = vrot.slane %v283, %v493
      %496 = vrot.lane.b32.xlu0 %v494, 12
      %v497 = vpop.permute.xlu0 %496
      %v499 = vmul.f32 %v279, %v497
      %v500 = vmul.f32 %v280, %v497
      %v501 = vmul.f32 %v281, %v497
      %v505 = vrot.slane %v499, 1
      %v506 = vrot.slane %v500, 1
      %v507 = vsel %vm427, %v505, %v506
      %v508 = vrot.slane %v501, 1
      %v509 = vsel %vm427, %v506, %v508
      %510 = vrot.lane.b32.xlu0 %v507, 116
      %v511 = vpop.permute.xlu0 %510
      %512 = vrot.lane.b32.xlu0 %v509, 116
      %v513 = vpop.permute.xlu0 %512
      %v516 = vadd.f32 %v489, %v511
      %v517 = vadd.f32 %v490, %v513
      %v518 = vlaneseq
      %v519 = vshrl.u32 %v518, 7
      %v520 = vsub.s32 3, %v519
      %v521 = vrot.slane %v283, %v520
      %523 = vrot.lane.b32.xlu0 %v521, 16
      %v524 = vpop.permute.xlu0 %523
      %v526 = vmul.f32 %v279, %v524
      %v527 = vmul.f32 %v280, %v524
      %v528 = vmul.f32 %v281, %v524
      %v532 = vrot.slane %v526, 1
      %v533 = vrot.slane %v527, 1
      %v534 = vsel %vm427, %v532, %v533
      %v535 = vrot.slane %v528, 1
      %v536 = vsel %vm427, %v533, %v535
      %537 = vrot.lane.b32.xlu0 %v534, 112
      %v538 = vpop.permute.xlu0 %537
      %539 = vrot.lane.b32.xlu0 %v536, 112
      %v540 = vpop.permute.xlu0 %539
      %v543 = vadd.f32 %v516, %v538
      %v544 = vadd.f32 %v517, %v540
      %v545 = vlaneseq
      %v546 = vshrl.u32 %v545, 7
      %v547 = vsub.s32 4, %v546
      %v548 = vrot.slane %v283, %v547
      %550 = vrot.lane.b32.xlu0 %v548, 20
      %v551 = vpop.permute.xlu0 %550
      %v553 = vmul.f32 %v279, %v551
      %v554 = vmul.f32 %v280, %v551
      %v555 = vmul.f32 %v281, %v551
      %v559 = vrot.slane %v553, 1
      %v560 = vrot.slane %v554, 1
      %v561 = vsel %vm427, %v559, %v560
      %v562 = vrot.slane %v555, 1
      %v563 = vsel %vm427, %v560, %v562
      %564 = vrot.lane.b32.xlu0 %v561, 108
      %v565 = vpop.permute.xlu0 %564
      %566 = vrot.lane.b32.xlu0 %v563, 108
      %v567 = vpop.permute.xlu0 %566
      %v570 = vadd.f32 %v543, %v565
      %v571 = vadd.f32 %v544, %v567
      %v572 = vlaneseq
      %v573 = vshrl.u32 %v572, 7
      %v574 = vsub.s32 5, %v573
      %v575 = vrot.slane %v283, %v574
      %577 = vrot.lane.b32.xlu0 %v575, 24
      %v578 = vpop.permute.xlu0 %577
      %v580 = vmul.f32 %v279, %v578
      %v581 = vmul.f32 %v280, %v578
      %v582 = vmul.f32 %v281, %v578
      %v586 = vrot.slane %v580, 1
      %v587 = vrot.slane %v581, 1
      %v588 = vsel %vm427, %v586, %v587
      %v589 = vrot.slane %v582, 1
      %v590 = vsel %vm427, %v587, %v589
      %591 = vrot.lane.b32.xlu0 %v588, 104
      %v592 = vpop.permute.xlu0 %591
      %593 = vrot.lane.b32.xlu0 %v590, 104
      %v594 = vpop.permute.xlu0 %593
      %v597 = vadd.f32 %v570, %v592
      %v598 = vadd.f32 %v571, %v594
      %v599 = vlaneseq
      %v600 = vshrl.u32 %v599, 7
      %v601 = vsub.s32 6, %v600
      %v602 = vrot.slane %v283, %v601
      %v603 = vmul.f32 %v279, %v602
      %v604 = vmul.f32 %v280, %v602
      %v605 = vmul.f32 %v281, %v602
      %vm609 = vcmask 1045504
      %v610 = vrot.slane %v603, 2
      %v611 = vrot.slane %v604, 2
      %v612 = vsel %vm609, %v610, %v611
      %v613 = vrot.slane %v605, 2
      %v614 = vsel %vm609, %v611, %v613
      %v617 = vadd.f32 %v597, %v612
      %v618 = vadd.f32 %v598, %v614
      %v619 = vlaneseq
      %v620 = vshrl.u32 %v619, 7
      %v621 = vsub.s32 7, %v620
      %v622 = vrot.slane %v283, %v621
      %624 = vrot.lane.b32.xlu0 %v622, 4
      %v625 = vpop.permute.xlu0 %624
      %v627 = vmul.f32 %v279, %v625
      %v628 = vmul.f32 %v280, %v625
      %v629 = vmul.f32 %v281, %v625
      %v633 = vrot.slane %v627, 2
      %v634 = vrot.slane %v628, 2
      %v635 = vsel %vm609, %v633, %v634
      %v636 = vrot.slane %v629, 2
      %v637 = vsel %vm609, %v634, %v636
      %638 = vrot.lane.b32.xlu0 %v635, 124
      %v639 = vpop.permute.xlu0 %638
      %640 = vrot.lane.b32.xlu0 %v637, 124
      %v641 = vpop.permute.xlu0 %640
      %v644 = vadd.f32 %v617, %v639
      %v645 = vadd.f32 %v618, %v641
      %v646 = vlaneseq
      %v647 = vshrl.u32 %v646, 7
      %v648 = vsub.s32 0, %v647
      %v649 = vrot.slane %v284, %v648
      %651 = vrot.lane.b32.xlu0 %v649, 8
      %v652 = vpop.permute.xlu0 %651
      %v654 = vmul.f32 %v279, %v652
      %v655 = vmul.f32 %v280, %v652
      %v656 = vmul.f32 %v281, %v652
      %v660 = vrot.slane %v654, 2
      %v661 = vrot.slane %v655, 2
      %v662 = vsel %vm609, %v660, %v661
      %v663 = vrot.slane %v656, 2
      %v664 = vsel %vm609, %v661, %v663
      %665 = vrot.lane.b32.xlu0 %v662, 120
      %v666 = vpop.permute.xlu0 %665
      %667 = vrot.lane.b32.xlu0 %v664, 120
      %v668 = vpop.permute.xlu0 %667
      %v671 = vadd.f32 %v644, %v666
      %v672 = vadd.f32 %v645, %v668
      %v673 = vlaneseq
      %v674 = vshrl.u32 %v673, 7
      %v675 = vsub.s32 1, %v674
      %v676 = vrot.slane %v284, %v675
      %678 = vrot.lane.b32.xlu0 %v676, 12
      %v679 = vpop.permute.xlu0 %678
      %v681 = vmul.f32 %v279, %v679
      %v682 = vmul.f32 %v280, %v679
      %v683 = vmul.f32 %v281, %v679
      %v687 = vrot.slane %v681, 2
      %v688 = vrot.slane %v682, 2
      %v689 = vsel %vm609, %v687, %v688
      %v690 = vrot.slane %v683, 2
      %v691 = vsel %vm609, %v688, %v690
      %692 = vrot.lane.b32.xlu0 %v689, 116
      %v693 = vpop.permute.xlu0 %692
      %694 = vrot.lane.b32.xlu0 %v691, 116
      %v695 = vpop.permute.xlu0 %694
      %v698 = vadd.f32 %v671, %v693
      %v699 = vadd.f32 %v672, %v695
      %v700 = vlaneseq
      %v701 = vshrl.u32 %v700, 7
      %v702 = vsub.s32 2, %v701
      %v703 = vrot.slane %v284, %v702
      %705 = vrot.lane.b32.xlu0 %v703, 16
      %v706 = vpop.permute.xlu0 %705
      %v708 = vmul.f32 %v279, %v706
      %v709 = vmul.f32 %v280, %v706
      %v710 = vmul.f32 %v281, %v706
      %v714 = vrot.slane %v708, 2
      %v715 = vrot.slane %v709, 2
      %v716 = vsel %vm609, %v714, %v715
      %v717 = vrot.slane %v710, 2
      %v718 = vsel %vm609, %v715, %v717
      %719 = vrot.lane.b32.xlu0 %v716, 112
      %v720 = vpop.permute.xlu0 %719
      %721 = vrot.lane.b32.xlu0 %v718, 112
      %v722 = vpop.permute.xlu0 %721
      %v725 = vadd.f32 %v698, %v720
      %v726 = vadd.f32 %v699, %v722
      %v727 = vlaneseq
      %v728 = vshrl.u32 %v727, 7
      %v729 = vsub.s32 3, %v728
      %v730 = vrot.slane %v284, %v729
      %732 = vrot.lane.b32.xlu0 %v730, 20
      %v733 = vpop.permute.xlu0 %732
      %v735 = vmul.f32 %v279, %v733
      %v736 = vmul.f32 %v280, %v733
      %v737 = vmul.f32 %v281, %v733
      %v741 = vrot.slane %v735, 2
      %v742 = vrot.slane %v736, 2
      %v743 = vsel %vm609, %v741, %v742
      %v744 = vrot.slane %v737, 2
      %v745 = vsel %vm609, %v742, %v744
      %746 = vrot.lane.b32.xlu0 %v743, 108
      %v747 = vpop.permute.xlu0 %746
      %748 = vrot.lane.b32.xlu0 %v745, 108
      %v749 = vpop.permute.xlu0 %748
      %v752 = vadd.f32 %v725, %v747
      %v753 = vadd.f32 %v726, %v749
      %v754 = vlaneseq
      %v755 = vshrl.u32 %v754, 7
      %v756 = vsub.s32 4, %v755
      %v757 = vrot.slane %v284, %v756
      %759 = vrot.lane.b32.xlu0 %v757, 24
      %v760 = vpop.permute.xlu0 %759
      %v762 = vmul.f32 %v279, %v760
      %v763 = vmul.f32 %v280, %v760
      %v764 = vmul.f32 %v281, %v760
      %v768 = vrot.slane %v762, 2
      %v769 = vrot.slane %v763, 2
      %v770 = vsel %vm609, %v768, %v769
      %v771 = vrot.slane %v764, 2
      %v772 = vsel %vm609, %v769, %v771
      %773 = vrot.lane.b32.xlu0 %v770, 104
      %v774 = vpop.permute.xlu0 %773
      %775 = vrot.lane.b32.xlu0 %v772, 104
      %v776 = vpop.permute.xlu0 %775
      %v779 = vadd.f32 %v752, %v774
      %v780 = vadd.f32 %v753, %v776
      %v781 = vlaneseq
      %v782 = vshrl.u32 %v781, 7
      %v783 = vsub.s32 5, %v782
      %v784 = vrot.slane %v284, %v783
      %v785 = vmul.f32 %v279, %v784
      %v786 = vmul.f32 %v280, %v784
      %v787 = vmul.f32 %v281, %v784
      %vm791 = vcmask 1044480
      %v792 = vrot.slane %v785, 3
      %v793 = vrot.slane %v786, 3
      %v794 = vsel %vm791, %v792, %v793
      %v795 = vrot.slane %v787, 3
      %v796 = vsel %vm791, %v793, %v795
      %v799 = vadd.f32 %v779, %v794
      %v800 = vadd.f32 %v780, %v796
      %v801 = vlaneseq
      %v802 = vshrl.u32 %v801, 7
      %v803 = vsub.s32 6, %v802
      %v804 = vrot.slane %v284, %v803
      %806 = vrot.lane.b32.xlu0 %v804, 4
      %v807 = vpop.permute.xlu0 %806
      %v809 = vmul.f32 %v279, %v807
      %v810 = vmul.f32 %v280, %v807
      %v811 = vmul.f32 %v281, %v807
      %v815 = vrot.slane %v809, 3
      %v816 = vrot.slane %v810, 3
      %v817 = vsel %vm791, %v815, %v816
      %v818 = vrot.slane %v811, 3
      %v819 = vsel %vm791, %v816, %v818
      %820 = vrot.lane.b32.xlu0 %v817, 124
      %v821 = vpop.permute.xlu0 %820
      %822 = vrot.lane.b32.xlu0 %v819, 124
      %v823 = vpop.permute.xlu0 %822
      %v826 = vadd.f32 %v799, %v821
      %v827 = vadd.f32 %v800, %v823
      %v828 = vlaneseq
      %v829 = vshrl.u32 %v828, 7
      %v830 = vsub.s32 7, %v829
      %v831 = vrot.slane %v284, %v830
      %833 = vrot.lane.b32.xlu0 %v831, 8
      %v834 = vpop.permute.xlu0 %833
      %v836 = vmul.f32 %v279, %v834
      %v837 = vmul.f32 %v280, %v834
      %v838 = vmul.f32 %v281, %v834
      %v842 = vrot.slane %v836, 3
      %v843 = vrot.slane %v837, 3
      %v844 = vsel %vm791, %v842, %v843
      %v845 = vrot.slane %v838, 3
      %v846 = vsel %vm791, %v843, %v845
      %847 = vrot.lane.b32.xlu0 %v844, 120
      %v848 = vpop.permute.xlu0 %847
      %849 = vrot.lane.b32.xlu0 %v846, 120
      %v850 = vpop.permute.xlu0 %849
      %v853 = vadd.f32 %v826, %v848
      %v854 = vadd.f32 %v827, %v850
      %v855 = vlaneseq
      %v856 = vshrl.u32 %v855, 7
      %v857 = vsub.s32 0, %v856
      %v858 = vrot.slane %v285, %v857
      %860 = vrot.lane.b32.xlu0 %v858, 12
      %v861 = vpop.permute.xlu0 %860
      %v863 = vmul.f32 %v279, %v861
      %v864 = vmul.f32 %v280, %v861
      %v865 = vmul.f32 %v281, %v861
      %v869 = vrot.slane %v863, 3
      %v870 = vrot.slane %v864, 3
      %v871 = vsel %vm791, %v869, %v870
      %v872 = vrot.slane %v865, 3
      %v873 = vsel %vm791, %v870, %v872
      %874 = vrot.lane.b32.xlu0 %v871, 116
      %v875 = vpop.permute.xlu0 %874
      %876 = vrot.lane.b32.xlu0 %v873, 116
      %v877 = vpop.permute.xlu0 %876
      %v880 = vadd.f32 %v853, %v875
      %v881 = vadd.f32 %v854, %v877
      %v882 = vlaneseq
      %v883 = vshrl.u32 %v882, 7
      %v884 = vsub.s32 1, %v883
      %v885 = vrot.slane %v285, %v884
      %887 = vrot.lane.b32.xlu0 %v885, 16
      %v888 = vpop.permute.xlu0 %887
      %v890 = vmul.f32 %v279, %v888
      %v891 = vmul.f32 %v280, %v888
      %v892 = vmul.f32 %v281, %v888
      %v896 = vrot.slane %v890, 3
      %v897 = vrot.slane %v891, 3
      %v898 = vsel %vm791, %v896, %v897
      %v899 = vrot.slane %v892, 3
      %v900 = vsel %vm791, %v897, %v899
      %901 = vrot.lane.b32.xlu0 %v898, 112
      %v902 = vpop.permute.xlu0 %901
      %903 = vrot.lane.b32.xlu0 %v900, 112
      %v904 = vpop.permute.xlu0 %903
      %v907 = vadd.f32 %v880, %v902
      %v908 = vadd.f32 %v881, %v904
      %v909 = vlaneseq
      %v910 = vshrl.u32 %v909, 7
      %v911 = vsub.s32 2, %v910
      %v912 = vrot.slane %v285, %v911
      %914 = vrot.lane.b32.xlu0 %v912, 20
      %v915 = vpop.permute.xlu0 %914
      %v917 = vmul.f32 %v279, %v915
      %v918 = vmul.f32 %v280, %v915
      %v919 = vmul.f32 %v281, %v915
      %v923 = vrot.slane %v917, 3
      %v924 = vrot.slane %v918, 3
      %v925 = vsel %vm791, %v923, %v924
      %v926 = vrot.slane %v919, 3
      %v927 = vsel %vm791, %v924, %v926
      %928 = vrot.lane.b32.xlu0 %v925, 108
      %v929 = vpop.permute.xlu0 %928
      %930 = vrot.lane.b32.xlu0 %v927, 108
      %v931 = vpop.permute.xlu0 %930
      %v934 = vadd.f32 %v907, %v929
      %v935 = vadd.f32 %v908, %v931
      %v936 = vlaneseq
      %v937 = vshrl.u32 %v936, 7
      %v938 = vsub.s32 3, %v937
      %v939 = vrot.slane %v285, %v938
      %941 = vrot.lane.b32.xlu0 %v939, 24
      %v942 = vpop.permute.xlu0 %941
      %v944 = vmul.f32 %v279, %v942
      %v945 = vmul.f32 %v280, %v942
      %v946 = vmul.f32 %v281, %v942
      %v950 = vrot.slane %v944, 3
      %v951 = vrot.slane %v945, 3
      %v952 = vsel %vm791, %v950, %v951
      %v953 = vrot.slane %v946, 3
      %v954 = vsel %vm791, %v951, %v953
      %955 = vrot.lane.b32.xlu0 %v952, 104
      %v956 = vpop.permute.xlu0 %955
      %957 = vrot.lane.b32.xlu0 %v954, 104
      %v958 = vpop.permute.xlu0 %957
      %v961 = vadd.f32 %v934, %v956
      %v962 = vadd.f32 %v935, %v958
      %v963 = vlaneseq
      %v964 = vshrl.u32 %v963, 7
      %v965 = vsub.s32 4, %v964
      %v966 = vrot.slane %v285, %v965
      %v967 = vmul.f32 %v279, %v966
      %v968 = vmul.f32 %v280, %v966
      %v969 = vmul.f32 %v281, %v966
      %vm973 = vcmask 1043456
      %v974 = vrot.slane %v967, 4
      %v975 = vrot.slane %v968, 4
      %v976 = vsel %vm973, %v974, %v975
      %v977 = vrot.slane %v969, 4
      %v978 = vsel %vm973, %v975, %v977
      %v981 = vadd.f32 %v961, %v976
      %v982 = vadd.f32 %v962, %v978
      %v983 = vlaneseq
      %v984 = vshrl.u32 %v983, 7
      %v985 = vsub.s32 5, %v984
      %v986 = vrot.slane %v285, %v985
      %988 = vrot.lane.b32.xlu0 %v986, 4
      %v989 = vpop.permute.xlu0 %988
      %v991 = vmul.f32 %v279, %v989
      %v992 = vmul.f32 %v280, %v989
      %v993 = vmul.f32 %v281, %v989
      %v997 = vrot.slane %v991, 4
      %v998 = vrot.slane %v992, 4
      %v999 = vsel %vm973, %v997, %v998
      %v1000 = vrot.slane %v993, 4
      %v1001 = vsel %vm973, %v998, %v1000
      %1002 = vrot.lane.b32.xlu0 %v999, 124
      %v1003 = vpop.permute.xlu0 %1002
      %1004 = vrot.lane.b32.xlu0 %v1001, 124
      %v1005 = vpop.permute.xlu0 %1004
      %v1008 = vadd.f32 %v981, %v1003
      %v1009 = vadd.f32 %v982, %v1005
      %v1010 = vlaneseq
      %v1011 = vshrl.u32 %v1010, 7
      %v1012 = vsub.s32 6, %v1011
      %v1013 = vrot.slane %v285, %v1012
      %1015 = vrot.lane.b32.xlu0 %v1013, 8
      %v1016 = vpop.permute.xlu0 %1015
      %v1018 = vmul.f32 %v279, %v1016
      %v1019 = vmul.f32 %v280, %v1016
      %v1020 = vmul.f32 %v281, %v1016
      %v1024 = vrot.slane %v1018, 4
      %v1025 = vrot.slane %v1019, 4
      %v1026 = vsel %vm973, %v1024, %v1025
      %v1027 = vrot.slane %v1020, 4
      %v1028 = vsel %vm973, %v1025, %v1027
      %1029 = vrot.lane.b32.xlu0 %v1026, 120
      %v1030 = vpop.permute.xlu0 %1029
      %1031 = vrot.lane.b32.xlu0 %v1028, 120
      %v1032 = vpop.permute.xlu0 %1031
      %v1035 = vadd.f32 %v1008, %v1030
      %v1036 = vadd.f32 %v1009, %v1032
      %v1037 = vlaneseq
      %v1038 = vshrl.u32 %v1037, 7
      %v1039 = vsub.s32 7, %v1038
      %v1040 = vrot.slane %v285, %v1039
      %1042 = vrot.lane.b32.xlu0 %v1040, 12
      %v1043 = vpop.permute.xlu0 %1042
      %v1045 = vmul.f32 %v279, %v1043
      %v1046 = vmul.f32 %v280, %v1043
      %v1047 = vmul.f32 %v281, %v1043
      %v1051 = vrot.slane %v1045, 4
      %v1052 = vrot.slane %v1046, 4
      %v1053 = vsel %vm973, %v1051, %v1052
      %v1054 = vrot.slane %v1047, 4
      %v1055 = vsel %vm973, %v1052, %v1054
      %1056 = vrot.lane.b32.xlu0 %v1053, 116
      %v1057 = vpop.permute.xlu0 %1056
      %1058 = vrot.lane.b32.xlu0 %v1055, 116
      %v1059 = vpop.permute.xlu0 %1058
      %v1062 = vadd.f32 %v1035, %v1057
      %v1063 = vadd.f32 %v1036, %v1059
      %v1064 = vlaneseq
      %v1065 = vshrl.u32 %v1064, 7
      %v1066 = vsub.s32 0, %v1065
      %v1067 = vrot.slane %v286, %v1066
      %1069 = vrot.lane.b32.xlu0 %v1067, 16
      %v1070 = vpop.permute.xlu0 %1069
      %v1072 = vmul.f32 %v279, %v1070
      %v1073 = vmul.f32 %v280, %v1070
      %v1074 = vmul.f32 %v281, %v1070
      %v1078 = vrot.slane %v1072, 4
      %v1079 = vrot.slane %v1073, 4
      %v1080 = vsel %vm973, %v1078, %v1079
      %v1081 = vrot.slane %v1074, 4
      %v1082 = vsel %vm973, %v1079, %v1081
      %1083 = vrot.lane.b32.xlu0 %v1080, 112
      %v1084 = vpop.permute.xlu0 %1083
      %1085 = vrot.lane.b32.xlu0 %v1082, 112
      %v1086 = vpop.permute.xlu0 %1085
      %v1089 = vadd.f32 %v1062, %v1084
      %v1090 = vadd.f32 %v1063, %v1086
      %v1091 = vlaneseq
      %v1092 = vshrl.u32 %v1091, 7
      %v1093 = vsub.s32 1, %v1092
      %v1094 = vrot.slane %v286, %v1093
      %1096 = vrot.lane.b32.xlu0 %v1094, 20
      %v1097 = vpop.permute.xlu0 %1096
      %v1099 = vmul.f32 %v279, %v1097
      %v1100 = vmul.f32 %v280, %v1097
      %v1101 = vmul.f32 %v281, %v1097
      %v1105 = vrot.slane %v1099, 4
      %v1106 = vrot.slane %v1100, 4
      %v1107 = vsel %vm973, %v1105, %v1106
      %v1108 = vrot.slane %v1101, 4
      %v1109 = vsel %vm973, %v1106, %v1108
      %1110 = vrot.lane.b32.xlu0 %v1107, 108
      %v1111 = vpop.permute.xlu0 %1110
      %1112 = vrot.lane.b32.xlu0 %v1109, 108
      %v1113 = vpop.permute.xlu0 %1112
      %v1116 = vadd.f32 %v1089, %v1111
      %v1117 = vadd.f32 %v1090, %v1113
      %v1118 = vlaneseq
      %v1119 = vshrl.u32 %v1118, 7
      %v1120 = vsub.s32 2, %v1119
      %v1121 = vrot.slane %v286, %v1120
      %1123 = vrot.lane.b32.xlu0 %v1121, 24
      %v1124 = vpop.permute.xlu0 %1123
      %v1126 = vmul.f32 %v279, %v1124
      %v1127 = vmul.f32 %v280, %v1124
      %v1128 = vmul.f32 %v281, %v1124
      %v1132 = vrot.slane %v1126, 4
      %v1133 = vrot.slane %v1127, 4
      %v1134 = vsel %vm973, %v1132, %v1133
      %v1135 = vrot.slane %v1128, 4
      %v1136 = vsel %vm973, %v1133, %v1135
      %1137 = vrot.lane.b32.xlu0 %v1134, 104
      %v1138 = vpop.permute.xlu0 %1137
      %1139 = vrot.lane.b32.xlu0 %v1136, 104
      %v1140 = vpop.permute.xlu0 %1139
      %v1143 = vadd.f32 %v1116, %v1138
      %v1144 = vadd.f32 %v1117, %v1140
      %v1145 = vlaneseq
      %v1146 = vshrl.u32 %v1145, 7
      %v1147 = vsub.s32 3, %v1146
      %v1148 = vrot.slane %v286, %v1147
      %v1149 = vmul.f32 %v279, %v1148
      %v1150 = vmul.f32 %v280, %v1148
      %v1151 = vmul.f32 %v281, %v1148
      %vm1155 = vcmask 1042432
      %v1156 = vrot.slane %v1149, 5
      %v1157 = vrot.slane %v1150, 5
      %v1158 = vsel %vm1155, %v1156, %v1157
      %v1159 = vrot.slane %v1151, 5
      %v1160 = vsel %vm1155, %v1157, %v1159
      %v1163 = vadd.f32 %v1143, %v1158
      %v1164 = vadd.f32 %v1144, %v1160
      %v1165 = vlaneseq
      %v1166 = vshrl.u32 %v1165, 7
      %v1167 = vsub.s32 4, %v1166
      %v1168 = vrot.slane %v286, %v1167
      %1170 = vrot.lane.b32.xlu0 %v1168, 4
      %v1171 = vpop.permute.xlu0 %1170
      %v1173 = vmul.f32 %v279, %v1171
      %v1174 = vmul.f32 %v280, %v1171
      %v1175 = vmul.f32 %v281, %v1171
      %v1179 = vrot.slane %v1173, 5
      %v1180 = vrot.slane %v1174, 5
      %v1181 = vsel %vm1155, %v1179, %v1180
      %v1182 = vrot.slane %v1175, 5
      %v1183 = vsel %vm1155, %v1180, %v1182
      %1184 = vrot.lane.b32.xlu0 %v1181, 124
      %v1185 = vpop.permute.xlu0 %1184
      %1186 = vrot.lane.b32.xlu0 %v1183, 124
      %v1187 = vpop.permute.xlu0 %1186
      %v1190 = vadd.f32 %v1163, %v1185
      %v1191 = vadd.f32 %v1164, %v1187
      %v1192 = vlaneseq
      %v1193 = vshrl.u32 %v1192, 7
      %v1194 = vsub.s32 5, %v1193
      %v1195 = vrot.slane %v286, %v1194
      %1197 = vrot.lane.b32.xlu0 %v1195, 8
      %v1198 = vpop.permute.xlu0 %1197
      %v1200 = vmul.f32 %v279, %v1198
      %v1201 = vmul.f32 %v280, %v1198
      %v1202 = vmul.f32 %v281, %v1198
      %v1206 = vrot.slane %v1200, 5
      %v1207 = vrot.slane %v1201, 5
      %v1208 = vsel %vm1155, %v1206, %v1207
      %v1209 = vrot.slane %v1202, 5
      %v1210 = vsel %vm1155, %v1207, %v1209
      %1211 = vrot.lane.b32.xlu0 %v1208, 120
      %v1212 = vpop.permute.xlu0 %1211
      %1213 = vrot.lane.b32.xlu0 %v1210, 120
      %v1214 = vpop.permute.xlu0 %1213
      %v1217 = vadd.f32 %v1190, %v1212
      %v1218 = vadd.f32 %v1191, %v1214
      %v1219 = vlaneseq
      %v1220 = vshrl.u32 %v1219, 7
      %v1221 = vsub.s32 6, %v1220
      %v1222 = vrot.slane %v286, %v1221
      %1224 = vrot.lane.b32.xlu0 %v1222, 12
      %v1225 = vpop.permute.xlu0 %1224
      %v1227 = vmul.f32 %v279, %v1225
      %v1228 = vmul.f32 %v280, %v1225
      %v1229 = vmul.f32 %v281, %v1225
      %v1233 = vrot.slane %v1227, 5
      %v1234 = vrot.slane %v1228, 5
      %v1235 = vsel %vm1155, %v1233, %v1234
      %v1236 = vrot.slane %v1229, 5
      %v1237 = vsel %vm1155, %v1234, %v1236
      %1238 = vrot.lane.b32.xlu0 %v1235, 116
      %v1239 = vpop.permute.xlu0 %1238
      %1240 = vrot.lane.b32.xlu0 %v1237, 116
      %v1241 = vpop.permute.xlu0 %1240
      %v1244 = vadd.f32 %v1217, %v1239
      %v1245 = vadd.f32 %v1218, %v1241
      %v1246 = vlaneseq
      %v1247 = vshrl.u32 %v1246, 7
      %v1248 = vsub.s32 7, %v1247
      %v1249 = vrot.slane %v286, %v1248
      %1251 = vrot.lane.b32.xlu0 %v1249, 16
      %v1252 = vpop.permute.xlu0 %1251
      %v1254 = vmul.f32 %v279, %v1252
      %v1255 = vmul.f32 %v280, %v1252
      %v1256 = vmul.f32 %v281, %v1252
      %v1260 = vrot.slane %v1254, 5
      %v1261 = vrot.slane %v1255, 5
      %v1262 = vsel %vm1155, %v1260, %v1261
      %v1263 = vrot.slane %v1256, 5
      %v1264 = vsel %vm1155, %v1261, %v1263
      %1265 = vrot.lane.b32.xlu0 %v1262, 112
      %v1266 = vpop.permute.xlu0 %1265
      %1267 = vrot.lane.b32.xlu0 %v1264, 112
      %v1268 = vpop.permute.xlu0 %1267
      %v1271 = vadd.f32 %v1244, %v1266
      %v1272 = vadd.f32 %v1245, %v1268
      %v1273 = vlaneseq
      %v1274 = vshrl.u32 %v1273, 7
      %v1275 = vsub.s32 0, %v1274
      %v1276 = vrot.slane %v287, %v1275
      %1278 = vrot.lane.b32.xlu0 %v1276, 20
      %v1279 = vpop.permute.xlu0 %1278
      %v1281 = vmul.f32 %v279, %v1279
      %v1282 = vmul.f32 %v280, %v1279
      %v1283 = vmul.f32 %v281, %v1279
      %v1287 = vrot.slane %v1281, 5
      %v1288 = vrot.slane %v1282, 5
      %v1289 = vsel %vm1155, %v1287, %v1288
      %v1290 = vrot.slane %v1283, 5
      %v1291 = vsel %vm1155, %v1288, %v1290
      %1292 = vrot.lane.b32.xlu0 %v1289, 108
      %v1293 = vpop.permute.xlu0 %1292
      %1294 = vrot.lane.b32.xlu0 %v1291, 108
      %v1295 = vpop.permute.xlu0 %1294
      %v1298 = vadd.f32 %v1271, %v1293
      %v1299 = vadd.f32 %v1272, %v1295
      %v1300 = vlaneseq
      %v1301 = vshrl.u32 %v1300, 7
      %v1302 = vsub.s32 1, %v1301
      %v1303 = vrot.slane %v287, %v1302
      %1305 = vrot.lane.b32.xlu0 %v1303, 24
      %v1306 = vpop.permute.xlu0 %1305
      %v1308 = vmul.f32 %v279, %v1306
      %v1309 = vmul.f32 %v280, %v1306
      %v1310 = vmul.f32 %v281, %v1306
      %v1314 = vrot.slane %v1308, 5
      %v1315 = vrot.slane %v1309, 5
      %v1316 = vsel %vm1155, %v1314, %v1315
      %v1317 = vrot.slane %v1310, 5
      %v1318 = vsel %vm1155, %v1315, %v1317
      %1319 = vrot.lane.b32.xlu0 %v1316, 104
      %v1320 = vpop.permute.xlu0 %1319
      %1321 = vrot.lane.b32.xlu0 %v1318, 104
      %v1322 = vpop.permute.xlu0 %1321
      %v1325 = vadd.f32 %v1298, %v1320
      %v1326 = vadd.f32 %v1299, %v1322
      %v1327 = vlaneseq
      %v1328 = vshrl.u32 %v1327, 7
      %v1329 = vsub.s32 2, %v1328
      %v1330 = vrot.slane %v287, %v1329
      %v1331 = vmul.f32 %v279, %v1330
      %v1332 = vmul.f32 %v280, %v1330
      %v1333 = vmul.f32 %v281, %v1330
      %vm1337 = vcmask 1041408
      %v1338 = vrot.slane %v1331, 6
      %v1339 = vrot.slane %v1332, 6
      %v1340 = vsel %vm1337, %v1338, %v1339
      %v1341 = vrot.slane %v1333, 6
      %v1342 = vsel %vm1337, %v1339, %v1341
      %v1345 = vadd.f32 %v1325, %v1340
      %v1346 = vadd.f32 %v1326, %v1342
      %v1347 = vlaneseq
      %v1348 = vshrl.u32 %v1347, 7
      %v1349 = vsub.s32 3, %v1348
      %v1350 = vrot.slane %v287, %v1349
      %1352 = vrot.lane.b32.xlu0 %v1350, 4
      %v1353 = vpop.permute.xlu0 %1352
      %v1355 = vmul.f32 %v279, %v1353
      %v1356 = vmul.f32 %v280, %v1353
      %v1357 = vmul.f32 %v281, %v1353
      %v1361 = vrot.slane %v1355, 6
      %v1362 = vrot.slane %v1356, 6
      %v1363 = vsel %vm1337, %v1361, %v1362
      %v1364 = vrot.slane %v1357, 6
      %v1365 = vsel %vm1337, %v1362, %v1364
      %1366 = vrot.lane.b32.xlu0 %v1363, 124
      %v1367 = vpop.permute.xlu0 %1366
      %1368 = vrot.lane.b32.xlu0 %v1365, 124
      %v1369 = vpop.permute.xlu0 %1368
      %v1372 = vadd.f32 %v1345, %v1367
      %v1373 = vadd.f32 %v1346, %v1369
      %v1374 = vlaneseq
      %v1375 = vshrl.u32 %v1374, 7
      %v1376 = vsub.s32 4, %v1375
      %v1377 = vrot.slane %v287, %v1376
      %1379 = vrot.lane.b32.xlu0 %v1377, 8
      %v1380 = vpop.permute.xlu0 %1379
      %v1382 = vmul.f32 %v279, %v1380
      %v1383 = vmul.f32 %v280, %v1380
      %v1384 = vmul.f32 %v281, %v1380
      %v1388 = vrot.slane %v1382, 6
      %v1389 = vrot.slane %v1383, 6
      %v1390 = vsel %vm1337, %v1388, %v1389
      %v1391 = vrot.slane %v1384, 6
      %v1392 = vsel %vm1337, %v1389, %v1391
      %1393 = vrot.lane.b32.xlu0 %v1390, 120
      %v1394 = vpop.permute.xlu0 %1393
      %1395 = vrot.lane.b32.xlu0 %v1392, 120
      %v1396 = vpop.permute.xlu0 %1395
      %v1399 = vadd.f32 %v1372, %v1394
      %v1400 = vadd.f32 %v1373, %v1396
      %v1401 = vlaneseq
      %v1402 = vshrl.u32 %v1401, 7
      %v1403 = vsub.s32 5, %v1402
      %v1404 = vrot.slane %v287, %v1403
      %1406 = vrot.lane.b32.xlu0 %v1404, 12
      %v1407 = vpop.permute.xlu0 %1406
      %v1409 = vmul.f32 %v279, %v1407
      %v1410 = vmul.f32 %v280, %v1407
      %v1411 = vmul.f32 %v281, %v1407
      %v1415 = vrot.slane %v1409, 6
      %v1416 = vrot.slane %v1410, 6
      %v1417 = vsel %vm1337, %v1415, %v1416
      %v1418 = vrot.slane %v1411, 6
      %v1419 = vsel %vm1337, %v1416, %v1418
      %1420 = vrot.lane.b32.xlu0 %v1417, 116
      %v1421 = vpop.permute.xlu0 %1420
      %1422 = vrot.lane.b32.xlu0 %v1419, 116
      %v1423 = vpop.permute.xlu0 %1422
      %v1426 = vadd.f32 %v1399, %v1421
      %v1427 = vadd.f32 %v1400, %v1423
      %v1428 = vlaneseq
      %v1429 = vshrl.u32 %v1428, 7
      %v1430 = vsub.s32 6, %v1429
      %v1431 = vrot.slane %v287, %v1430
      %1433 = vrot.lane.b32.xlu0 %v1431, 16
      %v1434 = vpop.permute.xlu0 %1433
      %v1436 = vmul.f32 %v279, %v1434
      %v1437 = vmul.f32 %v280, %v1434
      %v1438 = vmul.f32 %v281, %v1434
      %v1442 = vrot.slane %v1436, 6
      %v1443 = vrot.slane %v1437, 6
      %v1444 = vsel %vm1337, %v1442, %v1443
      %v1445 = vrot.slane %v1438, 6
      %v1446 = vsel %vm1337, %v1443, %v1445
      %1447 = vrot.lane.b32.xlu0 %v1444, 112
      %v1448 = vpop.permute.xlu0 %1447
      %1449 = vrot.lane.b32.xlu0 %v1446, 112
      %v1450 = vpop.permute.xlu0 %1449
      %v1453 = vadd.f32 %v1426, %v1448
      %v1454 = vadd.f32 %v1427, %v1450
      %v1455 = vlaneseq
      %v1456 = vshrl.u32 %v1455, 7
      %v1457 = vsub.s32 7, %v1456
      %v1458 = vrot.slane %v287, %v1457
      %1460 = vrot.lane.b32.xlu0 %v1458, 20
      %v1461 = vpop.permute.xlu0 %1460
      %v1463 = vmul.f32 %v279, %v1461
      %v1464 = vmul.f32 %v280, %v1461
      %v1465 = vmul.f32 %v281, %v1461
      %v1469 = vrot.slane %v1463, 6
      %v1470 = vrot.slane %v1464, 6
      %v1471 = vsel %vm1337, %v1469, %v1470
      %v1472 = vrot.slane %v1465, 6
      %v1473 = vsel %vm1337, %v1470, %v1472
      %1474 = vrot.lane.b32.xlu0 %v1471, 108
      %v1475 = vpop.permute.xlu0 %1474
      %1476 = vrot.lane.b32.xlu0 %v1473, 108
      %v1477 = vpop.permute.xlu0 %1476
      %v1480 = vadd.f32 %v1453, %v1475
      %v1481 = vadd.f32 %v1454, %v1477
      %v1482 = vlaneseq
      %v1483 = vshrl.u32 %v1482, 7
      %v1484 = vsub.s32 0, %v1483
      %v1485 = vrot.slane %v288, %v1484
      %1487 = vrot.lane.b32.xlu0 %v1485, 24
      %v1488 = vpop.permute.xlu0 %1487
      %v1490 = vmul.f32 %v279, %v1488
      %v1491 = vmul.f32 %v280, %v1488
      %v1492 = vmul.f32 %v281, %v1488
      %v1496 = vrot.slane %v1490, 6
      %v1497 = vrot.slane %v1491, 6
      %v1498 = vsel %vm1337, %v1496, %v1497
      %v1499 = vrot.slane %v1492, 6
      %v1500 = vsel %vm1337, %v1497, %v1499
      %1501 = vrot.lane.b32.xlu0 %v1498, 104
      %v1502 = vpop.permute.xlu0 %1501
      %1503 = vrot.lane.b32.xlu0 %v1500, 104
      %v1504 = vpop.permute.xlu0 %1503
      %v1507 = vadd.f32 %v1480, %v1502
      %v1508 = vadd.f32 %v1481, %v1504
      %v1509 = vld [vmem:[%s2] sm:$0x1]
      %v1511 = vlaneseq
      %v1512 = vshrl.u32 %v1511, 7
      %v1513 = vsub.s32 0, %v1512
      %v1514 = vrot.slane %v1509, %v1513
      %v1516 = vmul.f32 %v1507, %v1514
      %v1517 = vmul.f32 %v1508, %v1514
      %v1518 = vld [vmem:[%s3] sm:$0x1]
      %v1520 = vlaneseq
      %v1521 = vshrl.u32 %v1520, 7
      %v1522 = vsub.s32 0, %v1521
      %v1523 = vrot.slane %v1518, %v1522
      %v1525 = vadd.f32 %v1516, %v1523
      %v1526 = vadd.f32 %v1517, %v1523
      %v1527 = vmul.f32 %v1525, 0.5
      %v1528 = vmul.f32 %v1526, 0.5
      %v1529 = vmul.f32 %v1525, 0.70710677
      %v1530 = vmul.f32 %v1526, 0.70710677
      %v1531 = verf.f32.pop %v1529
      %v1532 = verf.f32.pop %v1530
      %v1533 = vadd.f32 %v1531, 1.0
      %v1534 = vadd.f32 %v1532, 1.0
      %v1535 = vmul.f32 %v1527, %v1533
      %v1536 = vmul.f32 %v1528, %v1534
      %v1537 = vld [vmem:[%s4] sm:$0xff]
      %v1538 = vld [vmem:[%s4 + $0x8] sm:$0xff]
      %v1539 = vld [vmem:[%s4 + $0x10] sm:$0xff]
      %v1540 = vld [vmem:[%s4 + $0x18] sm:$0xff]
      %v1541 = vld [vmem:[%s4 + $0x20] sm:$0xff]
      %v1542 = vld [vmem:[%s4 + $0x28] sm:$0xff]
      %v1543 = vld [vmem:[%s4 + $0x30] sm:$0xff]
      %v1544 = vld [vmem:[%s4 + $0x38] sm:$0xff]
      %vm1545 = vcmask 523264
      %v1547 = vsel %vm1545, %v1535, 0
      %v1550 = vsel %vm1545, %v1536, 0
      %1552 = vmatprep.subr.mxu0 0.0
      %1553 = vmatpush1.msra.mxu0 %v1537
      %1554 = vmatprep.subr.mxu0 0.0
      %1555 = vmatpush1.msra.mxu0 %v1538
      %1556 = vmatprep.subr.mxu0 0.0
      %1557 = vmatpush1.msra.mxu0 %v1539
      %1558 = vmatprep.subr.mxu0 0.0
      %1559 = vmatpush1.msra.mxu0 %v1540
      %1560 = vmatprep.subr.mxu0 0.0
      %1561 = vmatpush1.msra.mxu0 %v1541
      %1562 = vmatprep.subr.mxu0 0.0
      %1563 = vmatpush1.msra.mxu0 %v1542
      %1564 = vmatprep.subr.mxu0 0.0
      %1565 = vmatpush1.msra.mxu0 %v1543
      %1566 = vmatprep.subr.mxu0 0.0
      %1567 = vmatpush1.msra.mxu0 %v1544
      %1568 = vmatprep.subr.mxu0 0.0
      %1569 = vmatpush1.msra.mxu0 0.0
      %1570 = vmatprep.subr.mxu0 0.0
      %1571 = vmatpush1.msra.mxu0 0.0
      %1572 = vmatprep.subr.mxu0 0.0
      %1573 = vmatpush1.msra.mxu0 0.0
      %1574 = vmatprep.subr.mxu0 0.0
      %1575 = vmatpush1.msra.mxu0 0.0
      %1576 = vmatprep.subr.mxu0 0.0
      %1577 = vmatpush1.msra.mxu0 0.0
      %1578 = vmatprep.subr.mxu0 0.0
      %1579 = vmatpush1.msra.mxu0 0.0
      %1580 = vmatprep.subr.mxu0 0.0
      %1581 = vmatpush1.msra.mxu0 0.0
      %1582 = vmatprep.subr.mxu0 0.0
      %1583 = vmatpush1.msra.mxu0 0.0
      %1584 = vmatprep.subr.mxu0 0.0
      %1585 = vmatpush1.msra.mxu0 0.0
      %1586 = vmatprep.subr.mxu0 0.0
      %1587 = vmatpush1.msra.mxu0 0.0
      %1588 = vmatprep.subr.mxu0 0.0
      %1589 = vmatpush1.msra.mxu0 0.0
      %1590 = vmatprep.subr.mxu0 0.0
      %1591 = vmatpush1.msra.mxu0 0.0
      %1592 = vmatprep.subr.mxu0 0.0
      %1593 = vmatpush1.msra.mxu0 0.0
      %1594 = vmatprep.subr.mxu0 0.0
      %1595 = vmatpush1.msra.mxu0 0.0
      %1596 = vmatprep.subr.mxu0 0.0
      %1597 = vmatpush1.msra.mxu0 0.0
      %1598 = vmatprep.subr.mxu0 0.0
      %1599 = vmatpush1.msra.mxu0 0.0
      %1600 = vmatprep.subr.mxu0 0.0
      %1601 = vmatpush1.msra.mxu0 0.0
      %1602 = vmatprep.subr.mxu0 0.0
      %1603 = vmatpush1.msra.mxu0 0.0
      %1604 = vmatprep.subr.mxu0 0.0
      %1605 = vmatpush1.msra.mxu0 0.0
      %1606 = vmatprep.subr.mxu0 0.0
      %1607 = vmatpush1.msra.mxu0 0.0
      %1608 = vmatprep.subr.mxu0 0.0
      %1609 = vmatpush1.msra.mxu0 0.0
      %1610 = vmatprep.subr.mxu0 0.0
      %1611 = vmatpush1.msra.mxu0 0.0
      %1612 = vmatprep.subr.mxu0 0.0
      %1613 = vmatpush1.msra.mxu0 0.0
      %1614 = vmatprep.subr.mxu0 0.0
      %1615 = vmatpush1.msra.mxu0 0.0
      %1616 = vmatprep.mubr.f32.mxu0 0.0
      %1617 = vmatmul.mubr.f32.gmra.mrb[0].mxu0 %v1547
      %v1618 = vpop.f32.mrb[0].mxu0
      %v1619 = vadd.f32 0.0, %v1618
      %v1620 = vpop.f32.mrb[0].mxu0
      %1621 = vmatprep.mubr.f32.mxu0 0.0
      %1622 = vmatmul.mubr.f32.gmra.mrb[0].mxu0 %v1550
      %v1623 = vpop.f32.mrb[0].mxu0
      %v1624 = vadd.f32 0.0, %v1623
      %v1625 = vpop.f32.mrb[0].mxu0
      %1626 = vdwg.mxu0
      %v1627 = vld [vmem:[%s5] sm:$0x1]
      %v1629 = vlaneseq
      %v1630 = vshrl.u32 %v1629, 7
      %v1631 = vsub.s32 0, %v1630
      %v1632 = vrot.slane %v1627, %v1631
      %v1634 = vmul.f32 %v1619, %v1632
      %v1635 = vmul.f32 %v1624, %v1632
      %v1636 = vld [vmem:[%s6] sm:$0x1]
      %v1638 = vlaneseq
      %v1639 = vshrl.u32 %v1638, 7
      %v1640 = vsub.s32 0, %v1639
      %v1641 = vrot.slane %v1636, %v1640
      %v1643 = vadd.f32 %v1634, %v1641
      %v1644 = vadd.f32 %v1635, %v1641
      %v1645 = vmul.f32 %v1643, 0.5
      %v1646 = vmul.f32 %v1644, 0.5
      %v1647 = vmul.f32 %v1643, 0.70710677
      %v1648 = vmul.f32 %v1644, 0.70710677
      %v1649 = verf.f32.pop %v1647
      %v1650 = verf.f32.pop %v1648
      %v1651 = vadd.f32 %v1649, 1.0
      %v1652 = vadd.f32 %v1650, 1.0
      %v1653 = vmul.f32 %v1645, %v1651
      %v1654 = vmul.f32 %v1646, %v1652
      %1655 = vst [vmem:[%s278] sm:$0xff] %v1653
      %1656 = vst [vmem:[%s278 + $0x8] sm:$0xff] %v1654
      %p1657 = scmp.lt.s32.totalorder %s18, 1
      %s1658 = scalar_select %p1657, %s18, 1
      %s1659 = smul.addr %s1658, 2
      %s1660 = smul.addr %s1659, 8
      %s1661 = scalar_lea.vmem %s7, %s1660
      // Predicated region
      $region49: #{dwconv_forward.1} parent=47 // pred_check
        %p1662 = pneg %p188
      $region50: #{dwconv_forward.1} parent=47 // pred_check_branch
        %1664 = sbr.rel (%p1662) target = $region52
      $region51: #{dwconv_forward.1} parent=47 // pred_region
        _
      $region52: #{dwconv_forward.1} parent=47 // pred_fallthru
        _
    $region48: #{dwconv_forward.1} parent=5 // pred_fallthru
      _
    %p1665 = scmp.le.s32.totalorder 2, %s13
    // Predicated region
    $region53: #{dwconv_forward.1} parent=5 // pred_check
      %p1666 = pneg %p1665
    $region54: #{dwconv_forward.1} parent=5 // pred_check_branch
      %1668 = sbr.rel (%p1666) target = $region56
    $region55: #{dwconv_forward.1} parent=5 // pred_region
      %s1669 = ssub.s32 %s13, 2
      // Predicated region
      $region57: #{dwconv_forward.1} parent=55 // pred_check
        %p1670 = pneg %p194
      $region58: #{dwconv_forward.1} parent=55 // pred_check_branch
        %1672 = sbr.rel (%p1670) target = $region60
      $region59: #{dwconv_forward.1} parent=55 // pred_region
        %p1673 = scmp.lt.s32.totalorder %s19, 1
        %s1674 = scalar_select %p1673, %s19, 1
        %s1675 = smul.addr %s1674, 2
        %s1676 = smul.addr %s1675, 8
        %s1677 = scalar_lea.vmem %s7, %s1676
      $region60: #{dwconv_forward.1} parent=55 // pred_fallthru
        _
    $region56: #{dwconv_forward.1} parent=5 // pred_fallthru
      _
  $region6: #{dwconv_forward.1} parent=0 // loop_footer
    %s17 = sadd.s32 1, %s13
  $region7: #{dwconv_forward.1} parent=0 // loop_footer_branch
    %12 = sbr.rel target = $region3
  $region8: #{dwconv_forward.1} parent=0 // loop_exit
    _

</llo_original>
